<compile_context>
chip_gen: v6e
topology: v6e:2x2x1
jax: 0.10.0
libtpu: 0.0.40
codegen_flags: <defaults>
</compile_context>

<pallas_src>
import numpy as np
import jax
import jax.numpy as jnp
from jax.experimental import pallas as pl
from jax.experimental.pallas import tpu as pltpu

K_NEIGHBORS = 20
ACT_DTYPE = jnp.bfloat16
F32 = jnp.float32


# ---------------------------------------------------------------------------
# Pallas kernels (grid = (batch, N-tiles), both axes "parallel")
# ---------------------------------------------------------------------------

def _stage1_kernel(x_ref, w1_ref, b1_ref, w2_ref, b2_ref, wnc_ref, tnc_ref,
                   l2_ref, a_ref, c_ref):
    """mlp1 -> mlp2 -> fused dgCNN1 neighbor|center pre-matmul (BN folded)."""
    x = x_ref[0].astype(F32)                                       # (TN, 3)
    w1 = w1_ref[...]                                               # (3, 32) f32
    # K=3 contraction on the VPU: three broadcast multiply-adds (skip the MXU).
    h1 = (x[:, 0:1] * w1[0:1, :] + x[:, 1:2] * w1[1:2, :] + x[:, 2:3] * w1[2:3, :]
          + b1_ref[...])
    h1 = jnp.maximum(h1, 0.0)                                      # (TN, 32)
    h2 = jnp.dot(h1.astype(w2_ref.dtype), w2_ref[...],
                 preferred_element_type=F32) + b2_ref[...]
    h2 = jnp.maximum(h2, 0.0)                                      # (TN, 64)
    l2_ref[0] = h2.astype(l2_ref.dtype)
    # One fused MXU push for the neighbor|center parts of the edge conv.
    ac = jnp.dot(h2.astype(wnc_ref.dtype), wnc_ref[...],
                 preferred_element_type=F32) + tnc_ref[...]        # (TN, 128)
    a_ref[0] = ac[:, :64].astype(a_ref.dtype)
    c_ref[0] = ac[:, 64:].astype(c_ref.dtype)


def _stage2_kernel(m1_ref, c1_ref, w3_ref, b3_ref, w4_ref, b4_ref, wnc_ref, tnc_ref,
                   l3_ref, l5_ref, a_ref, c_ref):
    """dgCNN1 combine (relu(M1+C1)) fused with mlp3 -> mlp4 -> dgCNN2 pre-matmul."""
    l3 = jnp.maximum(m1_ref[0].astype(F32) + c1_ref[0].astype(F32), 0.0)  # (TN, 64)
    l3_ref[0] = l3.astype(l3_ref.dtype)
    h4 = jnp.dot(l3.astype(w3_ref.dtype), w3_ref[...],
                 preferred_element_type=F32) + b3_ref[...]
    h4 = jnp.maximum(h4, 0.0)                                      # (TN, 128)
    h5 = jnp.dot(h4.astype(w4_ref.dtype), w4_ref[...],
                 preferred_element_type=F32) + b4_ref[...]
    h5 = jnp.maximum(h5, 0.0)                                      # (TN, 256)
    l5_ref[0] = h5.astype(l5_ref.dtype)
    ac = jnp.dot(h5.astype(wnc_ref.dtype), wnc_ref[...],
                 preferred_element_type=F32) + tnc_ref[...]        # (TN, 512)
    a_ref[0] = ac[:, :256].astype(a_ref.dtype)
    c_ref[0] = ac[:, 256:].astype(c_ref.dtype)


def _edge_pool_kernel(m2_ref, c2_ref, l6_ref, pmax_ref):
    """dgCNN2 combine (relu(M2+C2)) + per-tile partial max (two-phase global pool)."""
    l6 = jnp.maximum(m2_ref[0].astype(F32) + c2_ref[0].astype(F32), 0.0)  # (TN, 256)
    l6_ref[0] = l6.astype(l6_ref.dtype)
    tile_max = jnp.max(l6, axis=0, keepdims=True)                  # (1, 256)
    # Broadcast into an (8, 256) block so the partial-max output keeps a clean
    # (8, 128)-aligned layout; the tiny cross-tile max runs in XLA afterwards.
    pmax_ref[0] = jnp.broadcast_to(tile_max, pmax_ref.shape[1:])


def _head_kernel(l6_ref, l3_ref, g_ref, w5b_ref, w5c_ref, w6_ref, b6_ref, out_ref):
    """mlp5 on cat([global, layer6, layer3]) (split matmuls; global part precomputed
    per batch in XLA) -> mlp6 as VPU multiply + lane reduce -> sigmoid."""
    h = (jnp.dot(l6_ref[0], w5b_ref[...], preferred_element_type=F32)
         + jnp.dot(l3_ref[0], w5c_ref[...], preferred_element_type=F32)
         + g_ref[0].astype(F32))
    h = jnp.maximum(h, 0.0)                                        # (TN, 256)
    logit = jnp.sum(h * w6_ref[...], axis=-1, keepdims=True) + b6_ref[...]
    out_ref[0] = (1.0 / (1.0 + jnp.exp(-logit))).astype(out_ref.dtype)


# ---------------------------------------------------------------------------
# BlockSpec helpers / XLA glue
# ---------------------------------------------------------------------------

def _round_up(v, m):
    return ((v + m - 1) // m) * m


def _spec_point(c, tn):
    return pl.BlockSpec((1, tn, c), lambda b, n: (b, n, 0))


def _spec_bcast(c):
    return pl.BlockSpec((1, 1, c), lambda b, n: (b, 0, 0))


def _spec_full(a):
    return pl.BlockSpec(a.shape, lambda b, n, _nd=a.ndim: (0,) * _nd)


def _fold_bn_into_edge_conv(w, gamma, beta, mean, var, eps=1e-5):
    """Conv2d(2*Cin, Cout, 1, bias=False) weight (Cout, 2*Cin) + eval-mode BN ->
    (Cin, Cout) neighbor weight, (Cin, Cout) center weight, (1, Cout) shift, using
    W @ [x_j - x_i ; x_i] = Wd @ x_j + (Wx - Wd) @ x_i."""
    cout, cin2 = w.shape
    cin = cin2 // 2
    s = gamma / jnp.sqrt(var + eps)
    wd, wx = w[:, :cin], w[:, cin:]
    wn = (s[:, None] * wd).T
    wc = (s[:, None] * (wx - wd)).T
    t = (beta - s * mean).reshape(1, cout)
    return wn, wc, t


def _knn_idx(feat, n_valid, k, approx=False):
    """k-NN indices, PyTorch DGCNN convention (top-k of negative squared distance).
    Distance matmul runs in bf16 with f32 accumulation; padded candidate columns
    (>= n_valid) are masked out.
    TODO(synk): the top-k itself has no clean Pallas TPU equivalent; it runs in XLA
    (optionally via the TPU-native lax.approx_max_k when approx=True)."""
    n_pad = feat.shape[1]
    inner = jnp.einsum("bnc,bmc->bnm", feat, feat, preferred_element_type=F32)
    sq = jnp.sum(feat.astype(F32) ** 2, axis=-1)
    neg_dist = 2.0 * inner - sq[:, :, None] - sq[:, None, :]
    if n_pad > n_valid:
        neg_dist = jnp.where(jnp.arange(n_pad)[None, None, :] < n_valid,
                             neg_dist, -jnp.inf)
    if approx:
        return jax.lax.approx_max_k(neg_dist, k)[1].astype(jnp.int32)
    return jax.lax.top_k(neg_dist, k)[1]                           # (B, Np, k) int32


def _gather_rows(a, idx):
    """a: (B, N, C), idx: (B, N, k) -> (B, N, k, C)."""
    return jax.vmap(lambda ab, ib: ab[ib])(a, idx)


def _max_gather(a, idx):
    """Per-point max over the k gathered neighbor rows of A: (B, N, C).
    TODO(synk): a vectorized dynamic row-gather against a VMEM-resident A is not cleanly
    expressible in Pallas TPU, so the gather + k-max run in XLA (fusable gather->reduce);
    only the (B, N, C) result crosses HBM into the next Pallas kernel."""
    return jax.vmap(lambda ab, ib: jnp.max(ab[ib], axis=1))(a, idx)


# ---------------------------------------------------------------------------
# Forward pass
# ---------------------------------------------------------------------------

def confidence_score_predictor(params, x, *, k=K_NEIGHBORS, tile_n=None,
                               act_dtype=ACT_DTYPE, approx_knn=False):
    """x: (B, N, 3) f32.  Returns ((B, N, 1) f32 confidence, aux with kNN indices)."""
    B, N, _ = x.shape
    assert N >= k, "need at least k points for kNN"
    tn = _round_up(min(tile_n or 128, _round_up(N, 16)), 16)       # 16-aligned tile
    n_pad = _round_up(N, tn)                                       # lane/sublane-clean N
    nt = n_pad // tn
    grid = (B, nt)
    cp = pltpu.CompilerParams(dimension_semantics=("parallel", "parallel"))

    x_p = jnp.pad(x, ((0, 0), (0, n_pad - N), (0, 0))) if n_pad > N else x

    def wcast(w):   # weights streamed in bf16; f32 accumulation happens in-kernel
        return w.astype(act_dtype)

    def brow(b):    # biases / BN shifts stay f32, shaped (1, C) for clean tiling
        return b.reshape(1, -1).astype(F32)

    wn1, wc1, t1 = _fold_bn_into_edge_conv(params["dg1_w"], params["dg1_gamma"],
                                           params["dg1_beta"], params["dg1_mean"],
                                           params["dg1_var"])
    wn2, wc2, t2 = _fold_bn_into_edge_conv(params["dg2_w"], params["dg2_gamma"],
                                           params["dg2_beta"], params["dg2_mean"],
                                           params["dg2_var"])
    wnc1 = wcast(jnp.concatenate([wn1, wc1], axis=1))              # (64, 128)
    tnc1 = jnp.concatenate([jnp.zeros_like(t1), t1], axis=1).astype(F32)
    wnc2 = wcast(jnp.concatenate([wn2, wc2], axis=1))              # (256, 512)
    tnc2 = jnp.concatenate([jnp.zeros_like(t2), t2], axis=1).astype(F32)

    # ---- stage 1: mlp1 -> mlp2 -> fused dgCNN1 pre-matmul ---------------------------
    s1_w = [params["w1"].astype(F32), brow(params["b1"]), wcast(params["w2"]),
            brow(params["b2"]), wnc1, tnc1]
    l2, a1, c1 = pl.pallas_call(
        _stage1_kernel,
        grid=grid,
        in_specs=[_spec_point(3, tn)] + [_spec_full(w) for w in s1_w],
        out_specs=(_spec_point(64, tn),) * 3,
        out_shape=(jax.ShapeDtypeStruct((B, n_pad, 64), act_dtype),) * 3,
        compiler_params=cp,
    )(x_p, *s1_w)

    idx1 = _knn_idx(l2, N, k, approx_knn)
    m1 = _max_gather(a1, idx1)                                     # (B, n_pad, 64)

    # ---- stage 2: dgCNN1 combine + mlp3 -> mlp4 -> fused dgCNN2 pre-matmul ----------
    s2_w = [wcast(params["w3"]), brow(params["b3"]), wcast(params["w4"]),
            brow(params["b4"]), wnc2, tnc2]
    l3, l5, a2, c2 = pl.pallas_call(
        _stage2_kernel,
        grid=grid,
        in_specs=[_spec_point(64, tn)] * 2 + [_spec_full(w) for w in s2_w],
        out_specs=(_spec_point(64, tn), _spec_point(256, tn),
                   _spec_point(256, tn), _spec_point(256, tn)),
        out_shape=(jax.ShapeDtypeStruct((B, n_pad, 64), act_dtype),
                   jax.ShapeDtypeStruct((B, n_pad, 256), act_dtype),
                   jax.ShapeDtypeStruct((B, n_pad, 256), act_dtype),
                   jax.ShapeDtypeStruct((B, n_pad, 256), act_dtype)),
        compiler_params=cp,
    )(m1, c1, *s2_w)

    idx2 = _knn_idx(l5, N, k, approx_knn)
    m2 = _max_gather(a2, idx2)                                     # (B, n_pad, 256)
    if n_pad > N:
        # Padded rows -> l6 row of exactly 0 (ReLU), which can never win the global max
        # since every real l6 value is already >= 0.
        m2 = jnp.where(jnp.arange(n_pad)[None, :, None] < N, m2,
                       jnp.asarray(-1e30, m2.dtype))

    # ---- dgCNN2 combine + two-phase global max pool (both grid axes parallel) -------
    l6, pmax = pl.pallas_call(
        _edge_pool_kernel,
        grid=grid,
        in_specs=[_spec_point(256, tn)] * 2,
        out_specs=(_spec_point(256, tn),
                   pl.BlockSpec((1, 8, 256), lambda b, n: (b, n, 0))),
        out_shape=(jax.ShapeDtypeStruct((B, n_pad, 256), act_dtype),
                   jax.ShapeDtypeStruct((B, nt * 8, 256), F32)),
        compiler_params=cp,
    )(m2, c2)

    # Tiny cross-tile reduce + once-per-batch global-feature matmul (hoisted out of the
    # per-tile head kernel) run in XLA.
    l7 = jnp.max(pmax, axis=1)                                     # (B, 256) f32
    g_bias = (l7 @ params["w5"][:256].astype(F32)
              + params["b5"].astype(F32)).reshape(B, 1, 256)

    # ---- head: mlp5 on cat([global, layer6, layer3]) (split matmuls) -> mlp6 --------
    head_w = [wcast(params["w5"][256:512]), wcast(params["w5"][512:]),
              params["w6"].reshape(1, -1).astype(F32),
              params["b6"].reshape(1, 1).astype(F32)]
    out = pl.pallas_call(
        _head_kernel,
        grid=grid,
        in_specs=[_spec_point(256, tn), _spec_point(64, tn), _spec_bcast(256)]
                 + [_spec_full(w) for w in head_w],
        out_specs=_spec_point(1, tn),
        out_shape=jax.ShapeDtypeStruct((B, n_pad, 1), F32),
        compiler_params=cp,
    )(l6, l3, g_bias, *head_w)

    return out[:, :N, :], {"idx1": idx1[:, :N], "idx2": idx2[:, :N]}


# ---------------------------------------------------------------------------
# Parameters + plain-JAX reference
# ---------------------------------------------------------------------------

def init_params(key):
    """Deterministic synthetic parameters mirroring PyTorch defaults; Linear / 1x1-conv
    weights stored pre-transposed as (in, out) where noted."""
    def uniform(kk, shape, bound):
        return jax.random.uniform(kk, shape, F32, -bound, bound)

    def linear(kk, fan_in, fan_out):
        kw, kb = jax.random.split(kk)
        bound = 1.0 / np.sqrt(fan_in)
        return uniform(kw, (fan_in, fan_out), bound), uniform(kb, (fan_out,), bound)

    def edge_conv(kk, cin, cout):    # Conv2d(2*cin, cout, 1, bias=False): (cout, 2*cin)
        return uniform(kk, (cout, 2 * cin), 1.0 / np.sqrt(2 * cin))

    keys = jax.random.split(key, 8)
    p = {}
    p["w1"], p["b1"] = linear(keys[0], 3, 32)       # mlp1
    p["w2"], p["b2"] = linear(keys[1], 32, 64)      # mlp2
    p["w3"], p["b3"] = linear(keys[2], 64, 128)     # mlp3
    p["w4"], p["b4"] = linear(keys[3], 128, 256)    # mlp4
    p["w5"], p["b5"] = linear(keys[4], 576, 256)    # mlp5 (576 = 256 + 256 + 64)
    p["w6"], p["b6"] = linear(keys[5], 256, 1)      # mlp6 (sigmoid head)
    p["dg1_w"] = edge_conv(keys[6], 64, 64)         # dgCNN1
    p["dg2_w"] = edge_conv(keys[7], 256, 256)       # dgCNN2
    for name, c in (("dg1", 64), ("dg2", 256)):     # eval-mode BatchNorm2d stats
        p[f"{name}_gamma"] = jnp.ones((c,), F32)
        p[f"{name}_beta"] = jnp.zeros((c,), F32)
        p[f"{name}_mean"] = jnp.zeros((c,), F32)
        p[f"{name}_var"] = jnp.ones((c,), F32)
    return p


def reference_forward(params, x, idx1, idx2, eps=1e-5):
    """Plain-JAX f32 reference of the (shape-generalized) forward, reusing the kNN
    indices from the kernel pipeline (kNN itself runs in XLA in both paths)."""
    relu = lambda a: jnp.maximum(a, 0.0)
    lin = lambda a, w, b: a @ w + b

    def dgcnn(feat, idx, w, gamma, beta, mean, var):
        cin = feat.shape[-1]
        wd, wx = w[:, :cin], w[:, cin:]
        nb = _gather_rows(feat, idx)                               # (B, N, k, Cin)
        center = feat[:, :, None, :]
        pre = (jnp.einsum("bnkc,oc->bnko", nb - center, wd)
               + jnp.einsum("bnc,oc->bno", feat, wx)[:, :, None, :])
        s = gamma / jnp.sqrt(var + eps)
        pre = pre * s + (beta - s * mean)
        return jnp.max(relu(pre), axis=2)                          # (B, N, Cout)

    l1 = relu(lin(x, params["w1"], params["b1"]))
    l2 = relu(lin(l1, params["w2"], params["b2"]))
    l3 = dgcnn(l2, idx1, params["dg1_w"], params["dg1_gamma"], params["dg1_beta"],
               params["dg1_mean"], params["dg1_var"])
    l4 = relu(lin(l3, params["w3"], params["b3"]))
    l5 = relu(lin(l4, params["w4"], params["b4"]))
    l6 = dgcnn(l5, idx2, params["dg2_w"], params["dg2_gamma"], params["dg2_beta"],
               params["dg2_mean"], params["dg2_var"])
    l7 = jnp.max(l6, axis=1)                                       # global max pool
    rep = jnp.broadcast_to(l7[:, None, :], l6.shape)
    l8 = jnp.concatenate([rep, l6, l3], axis=-1)                   # (B, N, 576)
    l9 = relu(lin(l8, params["w5"], params["b5"]))
    return jax.nn.sigmoid(lin(l9, params["w6"], params["b6"]))


if __name__ == "__main__":
    # Small test shapes (module's nominal N is 1000); N >= k = 20 and deliberately NOT a
    # multiple of the 128-point tile so the padding / masking path is exercised.
    B, N = 2, 240
    key = jax.random.PRNGKey(0)
    k_params, k_x = jax.random.split(key)
    params = init_params(k_params)
    x = jax.random.normal(k_x, (B, N, 3), F32)

    out, aux = confidence_score_predictor(params, x)
    out = jax.block_until_ready(out)
    assert out.shape == (B, N, 1)

    ref = jax.block_until_ready(reference_forward(params, x, aux["idx1"], aux["idx2"]))
    np.testing.assert_allclose(np.asarray(out), np.asarray(ref), rtol=2e-2, atol=2e-2)
    print("KERNEL_OK")
</pallas_src>

<mosaic_0001>
module attributes {stable_mosaic.version = 11 : i64} {
  func.func @_stage1_kernel(%arg0: i32, %arg1: i32, %arg2: memref<1x128x3xf32, #tpu.memory_space<vmem>>, %arg3: memref<3x32xf32, #tpu.memory_space<vmem>>, %arg4: memref<1x32xf32, #tpu.memory_space<vmem>>, %arg5: memref<32x64xbf16, #tpu.memory_space<vmem>>, %arg6: memref<1x64xf32, #tpu.memory_space<vmem>>, %arg7: memref<64x128xbf16, #tpu.memory_space<vmem>>, %arg8: memref<1x128xf32, #tpu.memory_space<vmem>>, %arg9: memref<1x128x64xbf16, #tpu.memory_space<vmem>>, %arg10: memref<1x128x64xbf16, #tpu.memory_space<vmem>>, %arg11: memref<1x128x64xbf16, #tpu.memory_space<vmem>>) attributes {dimension_semantics = [#tpu.dimension_semantics<parallel>, #tpu.dimension_semantics<parallel>], iteration_bounds = array<i64: 2, 2>, scalar_prefetch = 0 : i64, scratch_operands = 0 : i64, tpu.core_type = #tpu.core_type<tc>, window_params = [{transform_indices = @transform_0, window_bounds = array<i64: 1, 128, 3>}, {pipeline_mode = #tpu.pipeline_mode<synchronous>, transform_indices = @transform_1, window_bounds = array<i64: 3, 32>}, {pipeline_mode = #tpu.pipeline_mode<synchronous>, transform_indices = @transform_2, window_bounds = array<i64: 1, 32>}, {pipeline_mode = #tpu.pipeline_mode<synchronous>, transform_indices = @transform_3, window_bounds = array<i64: 32, 64>}, {pipeline_mode = #tpu.pipeline_mode<synchronous>, transform_indices = @transform_4, window_bounds = array<i64: 1, 64>}, {pipeline_mode = #tpu.pipeline_mode<synchronous>, transform_indices = @transform_5, window_bounds = array<i64: 64, 128>}, {pipeline_mode = #tpu.pipeline_mode<synchronous>, transform_indices = @transform_6, window_bounds = array<i64: 1, 128>}, {transform_indices = @transform_7, window_bounds = array<i64: 1, 128, 64>}, {transform_indices = @transform_8, window_bounds = array<i64: 1, 128, 64>}, {transform_indices = @transform_9, window_bounds = array<i64: 1, 128, 64>}]} {
    %c0 = arith.constant 0 : index
    %c0_0 = arith.constant 0 : index
    %c0_1 = arith.constant 0 : index
    %0 = vector.load %arg2[%c0, %c0_0, %c0_1] : memref<1x128x3xf32, #tpu.memory_space<vmem>>, vector<1x128x3xf32>
    %1 = vector.shape_cast %0 : vector<1x128x3xf32> to vector<128x3xf32>
    %c0_2 = arith.constant 0 : index
    %c0_3 = arith.constant 0 : index
    %2 = vector.load %arg3[%c0_2, %c0_3] : memref<3x32xf32, #tpu.memory_space<vmem>>, vector<3x32xf32>
    %3 = vector.extract_strided_slice %1 {offsets = [0, 0], sizes = [128, 1], strides = [1, 1]} : vector<128x3xf32> to vector<128x1xf32>
    %4 = vector.extract_strided_slice %2 {offsets = [0, 0], sizes = [1, 32], strides = [1, 1]} : vector<3x32xf32> to vector<1x32xf32>
    %5 = vector.broadcast %3 : vector<128x1xf32> to vector<128x32xf32>
    %6 = vector.broadcast %4 : vector<1x32xf32> to vector<128x32xf32>
    %7 = arith.mulf %5, %6 : vector<128x32xf32>
    %8 = vector.extract_strided_slice %1 {offsets = [0, 1], sizes = [128, 1], strides = [1, 1]} : vector<128x3xf32> to vector<128x1xf32>
    %9 = vector.extract_strided_slice %2 {offsets = [1, 0], sizes = [1, 32], strides = [1, 1]} : vector<3x32xf32> to vector<1x32xf32>
    %10 = vector.broadcast %8 : vector<128x1xf32> to vector<128x32xf32>
    %11 = vector.broadcast %9 : vector<1x32xf32> to vector<128x32xf32>
    %12 = arith.mulf %10, %11 : vector<128x32xf32>
    %13 = arith.addf %7, %12 : vector<128x32xf32>
    %14 = vector.extract_strided_slice %1 {offsets = [0, 2], sizes = [128, 1], strides = [1, 1]} : vector<128x3xf32> to vector<128x1xf32>
    %15 = vector.extract_strided_slice %2 {offsets = [2, 0], sizes = [1, 32], strides = [1, 1]} : vector<3x32xf32> to vector<1x32xf32>
    %16 = vector.broadcast %14 : vector<128x1xf32> to vector<128x32xf32>
    %17 = vector.broadcast %15 : vector<1x32xf32> to vector<128x32xf32>
    %18 = arith.mulf %16, %17 : vector<128x32xf32>
    %19 = arith.addf %13, %18 : vector<128x32xf32>
    %c0_4 = arith.constant 0 : index
    %c0_5 = arith.constant 0 : index
    %20 = vector.load %arg4[%c0_4, %c0_5] : memref<1x32xf32, #tpu.memory_space<vmem>>, vector<1x32xf32>
    %21 = vector.broadcast %20 : vector<1x32xf32> to vector<128x32xf32>
    %22 = arith.addf %19, %21 : vector<128x32xf32>
    %cst = arith.constant 0.000000e+00 : f32
    %23 = vector.broadcast %cst : f32 to vector<128x32xf32>
    %24 = arith.maximumf %22, %23 : vector<128x32xf32>
    %25 = arith.truncf %24 : vector<128x32xf32> to vector<128x32xbf16>
    %c0_6 = arith.constant 0 : index
    %c0_7 = arith.constant 0 : index
    %26 = vector.load %arg5[%c0_6, %c0_7] : memref<32x64xbf16, #tpu.memory_space<vmem>>, vector<32x64xbf16>
    %cst_8 = arith.constant dense<0.000000e+00> : vector<128x64xf32>
    %27 = tpu.matmul %25, %26, %cst_8 {dimension_numbers = #tpu.dot_dimension_numbers<[1], [0], [0], [1], [0, 0, 1, 1], [], []>} : vector<128x32xbf16>, vector<32x64xbf16>, vector<128x64xf32> -> vector<128x64xf32>
    %c0_9 = arith.constant 0 : index
    %c0_10 = arith.constant 0 : index
    %28 = vector.load %arg6[%c0_9, %c0_10] : memref<1x64xf32, #tpu.memory_space<vmem>>, vector<1x64xf32>
    %29 = vector.broadcast %28 : vector<1x64xf32> to vector<128x64xf32>
    %30 = arith.addf %27, %29 : vector<128x64xf32>
    %cst_11 = arith.constant 0.000000e+00 : f32
    %31 = vector.broadcast %cst_11 : f32 to vector<128x64xf32>
    %32 = arith.maximumf %30, %31 : vector<128x64xf32>
    %33 = arith.truncf %32 : vector<128x64xf32> to vector<128x64xbf16>
    %c0_12 = arith.constant 0 : index
    %c0_13 = arith.constant 0 : index
    %c0_14 = arith.constant 0 : index
    %34 = vector.load %arg9[%c0_12, %c0_13, %c0_14] : memref<1x128x64xbf16, #tpu.memory_space<vmem>>, vector<1x128x64xbf16>
    %35 = vector.shape_cast %34 : vector<1x128x64xbf16> to vector<128x64xbf16>
    %36 = vector.shape_cast %33 : vector<128x64xbf16> to vector<1x128x64xbf16>
    tpu.vector_store %arg9[%c0_12, %c0_13, %c0_14], %36 {strides = array<i32>} : memref<1x128x64xbf16, #tpu.memory_space<vmem>>, vector<1x128x64xbf16>,
    %37 = arith.truncf %32 : vector<128x64xf32> to vector<128x64xbf16>
    %c0_15 = arith.constant 0 : index
    %c0_16 = arith.constant 0 : index
    %38 = vector.load %arg7[%c0_15, %c0_16] : memref<64x128xbf16, #tpu.memory_space<vmem>>, vector<64x128xbf16>
    %cst_17 = arith.constant dense<0.000000e+00> : vector<128x128xf32>
    %39 = tpu.matmul %37, %38, %cst_17 {dimension_numbers = #tpu.dot_dimension_numbers<[1], [0], [0], [1], [0, 0, 1, 1], [], []>} : vector<128x64xbf16>, vector<64x128xbf16>, vector<128x128xf32> -> vector<128x128xf32>
    %c0_18 = arith.constant 0 : index
    %c0_19 = arith.constant 0 : index
    %40 = vector.load %arg8[%c0_18, %c0_19] : memref<1x128xf32, #tpu.memory_space<vmem>>, vector<1x128xf32>
    %41 = vector.broadcast %40 : vector<1x128xf32> to vector<128x128xf32>
    %42 = arith.addf %39, %41 : vector<128x128xf32>
    %43 = vector.extract_strided_slice %42 {offsets = [0, 0], sizes = [128, 64], strides = [1, 1]} : vector<128x128xf32> to vector<128x64xf32>
    %44 = arith.truncf %43 : vector<128x64xf32> to vector<128x64xbf16>
    %c0_20 = arith.constant 0 : index
    %c0_21 = arith.constant 0 : index
    %c0_22 = arith.constant 0 : index
    %45 = vector.load %arg10[%c0_20, %c0_21, %c0_22] : memref<1x128x64xbf16, #tpu.memory_space<vmem>>, vector<1x128x64xbf16>
    %46 = vector.shape_cast %45 : vector<1x128x64xbf16> to vector<128x64xbf16>
    %47 = vector.shape_cast %44 : vector<128x64xbf16> to vector<1x128x64xbf16>
    tpu.vector_store %arg10[%c0_20, %c0_21, %c0_22], %47 {strides = array<i32>} : memref<1x128x64xbf16, #tpu.memory_space<vmem>>, vector<1x128x64xbf16>,
    %48 = vector.extract_strided_slice %42 {offsets = [0, 64], sizes = [128, 64], strides = [1, 1]} : vector<128x128xf32> to vector<128x64xf32>
    %49 = arith.truncf %48 : vector<128x64xf32> to vector<128x64xbf16>
    %c0_23 = arith.constant 0 : index
    %c0_24 = arith.constant 0 : index
    %c0_25 = arith.constant 0 : index
    %50 = vector.load %arg11[%c0_23, %c0_24, %c0_25] : memref<1x128x64xbf16, #tpu.memory_space<vmem>>, vector<1x128x64xbf16>
    %51 = vector.shape_cast %50 : vector<1x128x64xbf16> to vector<128x64xbf16>
    %52 = vector.shape_cast %49 : vector<128x64xbf16> to vector<1x128x64xbf16>
    tpu.vector_store %arg11[%c0_23, %c0_24, %c0_25], %52 {strides = array<i32>} : memref<1x128x64xbf16, #tpu.memory_space<vmem>>, vector<1x128x64xbf16>,
    return
  }
  func.func @transform_0(%arg0: i32, %arg1: i32) -> (i32, i32, i32) {
    %c0_i32 = arith.constant 0 : i32
    %c0_i32_0 = arith.constant 0 : i32
    return %arg0, %arg1, %c0_i32 : i32, i32, i32
  }
  func.func @transform_1(%arg0: i32, %arg1: i32) -> (i32, i32) {
    %c0_i32 = arith.constant 0 : i32
    %c0_i32_0 = arith.constant 0 : i32
    %c0_i32_1 = arith.constant 0 : i32
    return %c0_i32, %c0_i32_0 : i32, i32
  }
  func.func @transform_2(%arg0: i32, %arg1: i32) -> (i32, i32) {
    %c0_i32 = arith.constant 0 : i32
    %c0_i32_0 = arith.constant 0 : i32
    %c0_i32_1 = arith.constant 0 : i32
    return %c0_i32, %c0_i32_0 : i32, i32
  }
  func.func @transform_3(%arg0: i32, %arg1: i32) -> (i32, i32) {
    %c0_i32 = arith.constant 0 : i32
    %c0_i32_0 = arith.constant 0 : i32
    %c0_i32_1 = arith.constant 0 : i32
    return %c0_i32, %c0_i32_0 : i32, i32
  }
  func.func @transform_4(%arg0: i32, %arg1: i32) -> (i32, i32) {
    %c0_i32 = arith.constant 0 : i32
    %c0_i32_0 = arith.constant 0 : i32
    %c0_i32_1 = arith.constant 0 : i32
    return %c0_i32, %c0_i32_0 : i32, i32
  }
  func.func @transform_5(%arg0: i32, %arg1: i32) -> (i32, i32) {
    %c0_i32 = arith.constant 0 : i32
    %c0_i32_0 = arith.constant 0 : i32
    %c0_i32_1 = arith.constant 0 : i32
    return %c0_i32, %c0_i32_0 : i32, i32
  }
  func.func @transform_6(%arg0: i32, %arg1: i32) -> (i32, i32) {
    %c0_i32 = arith.constant 0 : i32
    %c0_i32_0 = arith.constant 0 : i32
    %c0_i32_1 = arith.constant 0 : i32
    return %c0_i32, %c0_i32_0 : i32, i32
  }
  func.func @transform_7(%arg0: i32, %arg1: i32) -> (i32, i32, i32) {
    %c0_i32 = arith.constant 0 : i32
    %c0_i32_0 = arith.constant 0 : i32
    return %arg0, %arg1, %c0_i32 : i32, i32, i32
  }
  func.func @transform_8(%arg0: i32, %arg1: i32) -> (i32, i32, i32) {
    %c0_i32 = arith.constant 0 : i32
    %c0_i32_0 = arith.constant 0 : i32
    return %arg0, %arg1, %c0_i32 : i32, i32, i32
  }
  func.func @transform_9(%arg0: i32, %arg1: i32) -> (i32, i32, i32) {
    %c0_i32 = arith.constant 0 : i32
    %c0_i32_0 = arith.constant 0 : i32
    return %arg0, %arg1, %c0_i32 : i32, i32, i32
  }
}

</mosaic_0001>

<llo_original>
// kernel: tpu_custom_call.1
$region0: #{tpu_custom_call.1}
  #allocation0 [shape = 'u32[]', space=smem, size = 0x4, offset = 0x4, fixed_abs, tag = 'smem constant byte address 0x4 - core index']
  #allocation1 [shape = 'u32[144,128]{1,0:T(1,128)}', space=vmem, size = 0x12000, scoped, tag = 'internal scratch']
  %s0 = inlined_call_operand.vmem [shape: f32[2,256,3], index: 0, kind: input, shape index: {}]
  %s1 = inlined_call_operand.vmem [shape: f32[3,32], index: 1, kind: input, shape index: {}]
  %s2 = inlined_call_operand.vmem [shape: f32[1,32], index: 2, kind: input, shape index: {}]
  %s3 = inlined_call_operand.vmem [shape: bf16[32,64], index: 3, kind: input, shape index: {}]
  %s4 = inlined_call_operand.vmem [shape: f32[1,64], index: 4, kind: input, shape index: {}]
  %s5 = inlined_call_operand.vmem [shape: bf16[64,128], index: 5, kind: input, shape index: {}]
  %s6 = inlined_call_operand.vmem [shape: f32[1,128], index: 6, kind: input, shape index: {}]
  %s7 = inlined_call_operand.vmem [shape: bf16[2,256,64], index: 7, kind: output, shape index: {0}]
  %s8 = inlined_call_operand.vmem [shape: bf16[2,256,64], index: 8, kind: output, shape index: {1}]
  %s9 = inlined_call_operand.vmem [shape: bf16[2,256,64], index: 9, kind: output, shape index: {2}]
  %10 = xla_tuple %s7, %s8, %s9
  %s11 = sld [smem:[#allocation0]]
  $region77: #{tpu_custom_call.1} parent=0
    _
  %s13 = ssub.s32 1, %s11
  %s14 = scalar_select 0, %s13, %s11
  loop: start=0, step=1, limit=6
  $region2: #{tpu_custom_call.1} parent=0 // loop_pre_header
    _
  $region3: #{tpu_custom_call.1} parent=0 // loop_header
    %s16 = sphi 0, %s20
    %p17 = scmp.ge.s32.totalorder %s16, 6
    %s23 = sphi 0, %s35
    %s24 = sphi 0, %s31
    %s25 = sphi 0, %s23
    %s26 = sphi 0, %s24
    %s27 = sphi 0, %s25
    %s28 = sphi 0, %s26
    %s40 = sphi 0, %s42
    %s43 = sphi 0, %s40
    %s44 = sphi 0, %s43
    %s60 = sphi 0, %s44
    %s64 = sphi 0, %s64
    %s66 = sphi 0, %s64
    %s67 = sphi 0, %s66
    %s81 = sphi 0, %s67
    %s85 = sphi 0, %s85
    %s87 = sphi 0, %s85
    %s88 = sphi 0, %s87
    %s102 = sphi 0, %s88
    %s106 = sphi 0, %s106
    %s108 = sphi 0, %s106
    %s109 = sphi 0, %s108
    %s123 = sphi 0, %s109
    %s127 = sphi 0, %s127
    %s129 = sphi 0, %s127
    %s130 = sphi 0, %s129
    %s144 = sphi 0, %s130
    %s148 = sphi 0, %s148
    %s150 = sphi 0, %s148
    %s151 = sphi 0, %s150
    %s165 = sphi 0, %s151
    %s169 = sphi 0, %s169
    %s171 = sphi 0, %s169
    %s172 = sphi 0, %s171
    %s186 = sphi 0, %s172
    %s194 = sphi 0, %s196
    %s197 = sphi 0, %s194
    %s198 = sphi 0, %s197
    %s214 = sphi 0, %s198
    %s222 = sphi 0, %s224
    %s225 = sphi 0, %s222
    %s226 = sphi 0, %s225
    %s242 = sphi 0, %s226
    %s250 = sphi 0, %s252
    %s253 = sphi 0, %s250
    %s254 = sphi 0, %s253
    %s270 = sphi 0, %s254
  $region4: #{tpu_custom_call.1} parent=0 // loop_header_branch
    %19 = sbr.rel (%p17) target = $region8
  $region5: #{tpu_custom_call.1} parent=0 // loop_body
    %s21 = ssub.s32 %s16, 1
    %s22 = ssub.s32 %s16, 2
    %s29 = sadd.s32 1, %s24
    %p30 = scmp.ge.s32.totalorder %s29, 2
    %s31 = scalar_select %p30, 0, %s29
    %s32 = sadd.s32 1, %s23
    %s33 = scalar_select %p30, %s32, %s23
    %p34 = scmp.ge.s32.totalorder %s33, 2
    %s35 = scalar_select %p34, 0, %s33
    %s36 = ssub.s32 %s23, %s35
    %s37 = ssub.s32 %s24, %s31
    %s38 = sor.u32 %s36, %s37
    %p39 = scmp.eq.s32.totalorder %s38, 0
    %s41 = sadd.s32 %s40, 1
    %s42 = scalar_select %p39, %s40, %s41
    %p45 = pneg %p39
    %p46 = scmp.eq.s32.totalorder %s16, 3
    %p47 = por %p45, %p46
    %p48 = scmp.ne.s32.totalorder %s40, %s43
    %p49 = scmp.eq.s32.totalorder %s16, 0
    %p50 = por %p48, %p49
    %p51 = scmp.ne.s32.totalorder %s40, %s43
    %p52 = scmp.eq.s32.totalorder %s21, 3
    %p53 = por %p51, %p52
    %p54 = scmp.ne.s32.totalorder %s43, %s44
    %p55 = scmp.eq.s32.totalorder %s21, 0
    %p56 = por %p54, %p55
    %p57 = scmp.ne.s32.totalorder %s43, %s44
    %p58 = scmp.eq.s32.totalorder %s22, 3
    %p59 = por %p57, %p58
    %p61 = scmp.ne.s32.totalorder %s44, %s60
    %p62 = scmp.eq.s32.totalorder %s22, 0
    %p63 = por %p61, %p62
    %s65 = sadd.s32 %s64, 1
    %p68 = scmp.eq.s32.totalorder %s16, 3
    %p69 = scmp.ne.s32.totalorder %s64, %s66
    %p70 = scmp.eq.s32.totalorder %s16, 0
    %p71 = por %p69, %p70
    %p72 = scmp.ne.s32.totalorder %s64, %s66
    %p73 = scmp.eq.s32.totalorder %s21, 3
    %p74 = por %p72, %p73
    %p75 = scmp.ne.s32.totalorder %s66, %s67
    %p76 = scmp.eq.s32.totalorder %s21, 0
    %p77 = por %p75, %p76
    %p78 = scmp.ne.s32.totalorder %s66, %s67
    %p79 = scmp.eq.s32.totalorder %s22, 3
    %p80 = por %p78, %p79
    %p82 = scmp.ne.s32.totalorder %s67, %s81
    %p83 = scmp.eq.s32.totalorder %s22, 0
    %p84 = por %p82, %p83
    %s86 = sadd.s32 %s85, 1
    %p89 = scmp.eq.s32.totalorder %s16, 3
    %p90 = scmp.ne.s32.totalorder %s85, %s87
    %p91 = scmp.eq.s32.totalorder %s16, 0
    %p92 = por %p90, %p91
    %p93 = scmp.ne.s32.totalorder %s85, %s87
    %p94 = scmp.eq.s32.totalorder %s21, 3
    %p95 = por %p93, %p94
    %p96 = scmp.ne.s32.totalorder %s87, %s88
    %p97 = scmp.eq.s32.totalorder %s21, 0
    %p98 = por %p96, %p97
    %p99 = scmp.ne.s32.totalorder %s87, %s88
    %p100 = scmp.eq.s32.totalorder %s22, 3
    %p101 = por %p99, %p100
    %p103 = scmp.ne.s32.totalorder %s88, %s102
    %p104 = scmp.eq.s32.totalorder %s22, 0
    %p105 = por %p103, %p104
    %s107 = sadd.s32 %s106, 1
    %p110 = scmp.eq.s32.totalorder %s16, 3
    %p111 = scmp.ne.s32.totalorder %s106, %s108
    %p112 = scmp.eq.s32.totalorder %s16, 0
    %p113 = por %p111, %p112
    %p114 = scmp.ne.s32.totalorder %s106, %s108
    %p115 = scmp.eq.s32.totalorder %s21, 3
    %p116 = por %p114, %p115
    %p117 = scmp.ne.s32.totalorder %s108, %s109
    %p118 = scmp.eq.s32.totalorder %s21, 0
    %p119 = por %p117, %p118
    %p120 = scmp.ne.s32.totalorder %s108, %s109
    %p121 = scmp.eq.s32.totalorder %s22, 3
    %p122 = por %p120, %p121
    %p124 = scmp.ne.s32.totalorder %s109, %s123
    %p125 = scmp.eq.s32.totalorder %s22, 0
    %p126 = por %p124, %p125
    %s128 = sadd.s32 %s127, 1
    %p131 = scmp.eq.s32.totalorder %s16, 3
    %p132 = scmp.ne.s32.totalorder %s127, %s129
    %p133 = scmp.eq.s32.totalorder %s16, 0
    %p134 = por %p132, %p133
    %p135 = scmp.ne.s32.totalorder %s127, %s129
    %p136 = scmp.eq.s32.totalorder %s21, 3
    %p137 = por %p135, %p136
    %p138 = scmp.ne.s32.totalorder %s129, %s130
    %p139 = scmp.eq.s32.totalorder %s21, 0
    %p140 = por %p138, %p139
    %p141 = scmp.ne.s32.totalorder %s129, %s130
    %p142 = scmp.eq.s32.totalorder %s22, 3
    %p143 = por %p141, %p142
    %p145 = scmp.ne.s32.totalorder %s130, %s144
    %p146 = scmp.eq.s32.totalorder %s22, 0
    %p147 = por %p145, %p146
    %s149 = sadd.s32 %s148, 1
    %p152 = scmp.eq.s32.totalorder %s16, 3
    %p153 = scmp.ne.s32.totalorder %s148, %s150
    %p154 = scmp.eq.s32.totalorder %s16, 0
    %p155 = por %p153, %p154
    %p156 = scmp.ne.s32.totalorder %s148, %s150
    %p157 = scmp.eq.s32.totalorder %s21, 3
    %p158 = por %p156, %p157
    %p159 = scmp.ne.s32.totalorder %s150, %s151
    %p160 = scmp.eq.s32.totalorder %s21, 0
    %p161 = por %p159, %p160
    %p162 = scmp.ne.s32.totalorder %s150, %s151
    %p163 = scmp.eq.s32.totalorder %s22, 3
    %p164 = por %p162, %p163
    %p166 = scmp.ne.s32.totalorder %s151, %s165
    %p167 = scmp.eq.s32.totalorder %s22, 0
    %p168 = por %p166, %p167
    %s170 = sadd.s32 %s169, 1
    %p173 = scmp.eq.s32.totalorder %s16, 3
    %p174 = scmp.ne.s32.totalorder %s169, %s171
    %p175 = scmp.eq.s32.totalorder %s16, 0
    %p176 = por %p174, %p175
    %p177 = scmp.ne.s32.totalorder %s169, %s171
    %p178 = scmp.eq.s32.totalorder %s21, 3
    %p179 = por %p177, %p178
    %p180 = scmp.ne.s32.totalorder %s171, %s172
    %p181 = scmp.eq.s32.totalorder %s21, 0
    %p182 = por %p180, %p181
    %p183 = scmp.ne.s32.totalorder %s171, %s172
    %p184 = scmp.eq.s32.totalorder %s22, 3
    %p185 = por %p183, %p184
    %p187 = scmp.ne.s32.totalorder %s172, %s186
    %p188 = scmp.eq.s32.totalorder %s22, 0
    %p189 = por %p187, %p188
    %s190 = ssub.s32 %s23, %s35
    %s191 = ssub.s32 %s24, %s31
    %s192 = sor.u32 %s190, %s191
    %p193 = scmp.eq.s32.totalorder %s192, 0
    %s195 = sadd.s32 %s194, 1
    %s196 = scalar_select %p193, %s194, %s195
    %p199 = pneg %p193
    %p200 = scmp.eq.s32.totalorder %s16, 3
    %p201 = por %p199, %p200
    %p202 = scmp.ne.s32.totalorder %s194, %s197
    %p203 = scmp.eq.s32.totalorder %s16, 0
    %p204 = por %p202, %p203
    %p205 = scmp.ne.s32.totalorder %s194, %s197
    %p206 = scmp.eq.s32.totalorder %s21, 3
    %p207 = por %p205, %p206
    %p208 = scmp.ne.s32.totalorder %s197, %s198
    %p209 = scmp.eq.s32.totalorder %s21, 0
    %p210 = por %p208, %p209
    %p211 = scmp.ne.s32.totalorder %s197, %s198
    %p212 = scmp.eq.s32.totalorder %s22, 3
    %p213 = por %p211, %p212
    %p215 = scmp.ne.s32.totalorder %s198, %s214
    %p216 = scmp.eq.s32.totalorder %s22, 0
    %p217 = por %p215, %p216
    %s218 = ssub.s32 %s23, %s35
    %s219 = ssub.s32 %s24, %s31
    %s220 = sor.u32 %s218, %s219
    %p221 = scmp.eq.s32.totalorder %s220, 0
    %s223 = sadd.s32 %s222, 1
    %s224 = scalar_select %p221, %s222, %s223
    %p227 = pneg %p221
    %p228 = scmp.eq.s32.totalorder %s16, 3
    %p229 = por %p227, %p228
    %p230 = scmp.ne.s32.totalorder %s222, %s225
    %p231 = scmp.eq.s32.totalorder %s16, 0
    %p232 = por %p230, %p231
    %p233 = scmp.ne.s32.totalorder %s222, %s225
    %p234 = scmp.eq.s32.totalorder %s21, 3
    %p235 = por %p233, %p234
    %p236 = scmp.ne.s32.totalorder %s225, %s226
    %p237 = scmp.eq.s32.totalorder %s21, 0
    %p238 = por %p236, %p237
    %p239 = scmp.ne.s32.totalorder %s225, %s226
    %p240 = scmp.eq.s32.totalorder %s22, 3
    %p241 = por %p239, %p240
    %p243 = scmp.ne.s32.totalorder %s226, %s242
    %p244 = scmp.eq.s32.totalorder %s22, 0
    %p245 = por %p243, %p244
    %s246 = ssub.s32 %s23, %s35
    %s247 = ssub.s32 %s24, %s31
    %s248 = sor.u32 %s246, %s247
    %p249 = scmp.eq.s32.totalorder %s248, 0
    %s251 = sadd.s32 %s250, 1
    %s252 = scalar_select %p249, %s250, %s251
    %p255 = pneg %p249
    %p256 = scmp.eq.s32.totalorder %s16, 3
    %p257 = por %p255, %p256
    %p258 = scmp.ne.s32.totalorder %s250, %s253
    %p259 = scmp.eq.s32.totalorder %s16, 0
    %p260 = por %p258, %p259
    %p261 = scmp.ne.s32.totalorder %s250, %s253
    %p262 = scmp.eq.s32.totalorder %s21, 3
    %p263 = por %p261, %p262
    %p264 = scmp.ne.s32.totalorder %s253, %s254
    %p265 = scmp.eq.s32.totalorder %s21, 0
    %p266 = por %p264, %p265
    %p267 = scmp.ne.s32.totalorder %s253, %s254
    %p268 = scmp.eq.s32.totalorder %s22, 3
    %p269 = por %p267, %p268
    %p271 = scmp.ne.s32.totalorder %s254, %s270
    %p272 = scmp.eq.s32.totalorder %s22, 0
    %p273 = por %p271, %p272
    %p274 = scmp.le.s32.totalorder 1, %s16
    %p275 = scmp.lt.s32.totalorder %s16, 5
    %p276 = pnand %p274, %p275
    %p277 = pneg %p276
    // Predicated region
    $region9: #{tpu_custom_call.1} parent=5 // pred_check
      _
    $region10: #{tpu_custom_call.1} parent=5 // pred_check_branch
      %279 = sbr.rel (%p276) target = $region12
    $region11: #{tpu_custom_call.1} parent=5 // pred_region
      %s280 = ssub.s32 %s16, 1
      // Predicated region
      $region13: #{tpu_custom_call.1} parent=11 // pred_check
        %p281 = pneg %p77
      $region14: #{tpu_custom_call.1} parent=11 // pred_check_branch
        %283 = sbr.rel (%p281) target = $region16
      $region15: #{tpu_custom_call.1} parent=11 // pred_region
        _
      $region16: #{tpu_custom_call.1} parent=11 // pred_fallthru
        _
      // Predicated region
      $region17: #{tpu_custom_call.1} parent=11 // pred_check
        %p284 = pneg %p98
      $region18: #{tpu_custom_call.1} parent=11 // pred_check_branch
        %286 = sbr.rel (%p284) target = $region20
      $region19: #{tpu_custom_call.1} parent=11 // pred_region
        _
      $region20: #{tpu_custom_call.1} parent=11 // pred_fallthru
        _
      // Predicated region
      $region21: #{tpu_custom_call.1} parent=11 // pred_check
        %p287 = pneg %p119
      $region22: #{tpu_custom_call.1} parent=11 // pred_check_branch
        %289 = sbr.rel (%p287) target = $region24
      $region23: #{tpu_custom_call.1} parent=11 // pred_region
        _
      $region24: #{tpu_custom_call.1} parent=11 // pred_fallthru
        _
      // Predicated region
      $region25: #{tpu_custom_call.1} parent=11 // pred_check
        %p290 = pneg %p140
      $region26: #{tpu_custom_call.1} parent=11 // pred_check_branch
        %292 = sbr.rel (%p290) target = $region28
      $region27: #{tpu_custom_call.1} parent=11 // pred_region
        _
      $region28: #{tpu_custom_call.1} parent=11 // pred_fallthru
        _
      // Predicated region
      $region29: #{tpu_custom_call.1} parent=11 // pred_check
        %p293 = pneg %p161
      $region30: #{tpu_custom_call.1} parent=11 // pred_check_branch
        %295 = sbr.rel (%p293) target = $region32
      $region31: #{tpu_custom_call.1} parent=11 // pred_region
        _
      $region32: #{tpu_custom_call.1} parent=11 // pred_fallthru
        _
      // Predicated region
      $region33: #{tpu_custom_call.1} parent=11 // pred_check
        %p296 = pneg %p182
      $region34: #{tpu_custom_call.1} parent=11 // pred_check_branch
        %298 = sbr.rel (%p296) target = $region36
      $region35: #{tpu_custom_call.1} parent=11 // pred_region
        _
      $region36: #{tpu_custom_call.1} parent=11 // pred_fallthru
        _
    $region12: #{tpu_custom_call.1} parent=5 // pred_fallthru
      _
    %p299 = scmp.lt.s32.totalorder %s16, 4
    // Predicated region
    $region37: #{tpu_custom_call.1} parent=5 // pred_check
      %p300 = pneg %p299
    $region38: #{tpu_custom_call.1} parent=5 // pred_check_branch
      %302 = sbr.rel (%p300) target = $region40
    $region39: #{tpu_custom_call.1} parent=5 // pred_region
      // Predicated region
      $region41: #{tpu_custom_call.1} parent=39 // pred_check
        %p303 = pneg %p50
      $region42: #{tpu_custom_call.1} parent=39 // pred_check_branch
        %305 = sbr.rel (%p303) target = $region44
      $region43: #{tpu_custom_call.1} parent=39 // pred_region
        %s306 = smul.u32 16, %s24
        %p307 = scmp.lt.s32.totalorder %s23, 1
        %s308 = scalar_select %p307, %s23, 1
        %p309 = scmp.lt.s32.totalorder %s306, 31
        %s310 = scalar_select %p309, %s306, 31
        %s311 = smul.addr %s308, 32
        %s312 = sadd.s32 %s310, %s311
        %s313 = smul.addr %s312, 8
        %s314 = scalar_lea.vmem %s0, %s313
        %s315 = smul.u32 16, %s24
      $region44: #{tpu_custom_call.1} parent=39 // pred_fallthru
        _
    $region40: #{tpu_custom_call.1} parent=5 // pred_fallthru
      _
    %p316 = scmp.le.s32.totalorder 1, %s16
    %p317 = scmp.lt.s32.totalorder %s16, 5
    %p318 = pnand %p316, %p317
    %p319 = pneg %p318
    // Predicated region
    $region45: #{tpu_custom_call.1} parent=5 // pred_check
      _
    $region46: #{tpu_custom_call.1} parent=5 // pred_check_branch
      %321 = sbr.rel (%p318) target = $region48
    $region47: #{tpu_custom_call.1} parent=5 // pred_region
      %s322 = ssub.s32 %s16, 1
      %s323 = smul.u32 16, %s26
      %p324 = scmp.lt.s32.totalorder %s25, 1
      %s325 = scalar_select %p324, %s25, 1
      %p326 = scmp.lt.s32.totalorder %s323, 31
      %s327 = scalar_select %p326, %s323, 31
      %s328 = smul.addr %s325, 32
      %s329 = sadd.s32 %s327, %s328
      %s330 = smul.addr %s329, 8
      %s331 = scalar_lea.vmem %s0, %s330
      %p332 = pneg %p56
      %p333 = pneg %p53
      %p334 = pneg %p77
      %p335 = pneg %p74
      %p336 = pneg %p98
      %p337 = pneg %p95
      %p338 = pneg %p119
      %p339 = pneg %p116
      %p340 = pneg %p140
      %p341 = pneg %p137
      %p342 = pneg %p161
      %p343 = pneg %p158
      %p344 = pneg %p182
      %p345 = pneg %p179
      %p346 = pneg %p210
      %p347 = pneg %p207
      %s348 = smul.u32 16, %s26
      %p349 = scmp.lt.s32.totalorder %s25, 1
      %s350 = scalar_select %p349, %s25, 1
      %p351 = scmp.lt.s32.totalorder %s348, 31
      %s352 = scalar_select %p351, %s348, 31
      %s353 = smul.addr %s350, 32
      %s354 = sadd.s32 %s352, %s353
      %s355 = smul.addr %s354, 4
      %s356 = scalar_lea.vmem %s7, %s355
      %p357 = pneg %p238
      %p358 = pneg %p235
      %s359 = smul.u32 16, %s26
      %p360 = scmp.lt.s32.totalorder %s25, 1
      %s361 = scalar_select %p360, %s25, 1
      %p362 = scmp.lt.s32.totalorder %s359, 31
      %s363 = scalar_select %p362, %s359, 31
      %s364 = smul.addr %s361, 32
      %s365 = sadd.s32 %s363, %s364
      %s366 = smul.addr %s365, 4
      %s367 = scalar_lea.vmem %s8, %s366
      %p368 = pneg %p266
      %p369 = pneg %p263
      %s370 = smul.u32 16, %s26
      %p371 = scmp.lt.s32.totalorder %s25, 1
      %s372 = scalar_select %p371, %s25, 1
      %p373 = scmp.lt.s32.totalorder %s370, 31
      %s374 = scalar_select %p373, %s370, 31
      %s375 = smul.addr %s372, 32
      %s376 = sadd.s32 %s374, %s375
      %s377 = smul.addr %s376, 4
      %s378 = scalar_lea.vmem %s9, %s377
      %s379 = smul.u32 16, %s26
      %p380 = scmp.lt.s32.totalorder %s25, 1
      %s381 = scalar_select %p380, %s25, 1
      %p382 = scmp.lt.s32.totalorder %s379, 31
      %s383 = scalar_select %p382, %s379, 31
      %s384 = smul.addr %s381, 32
      %s385 = sadd.s32 %s383, %s384
      %s386 = smul.addr %s385, 8
      %s387 = scalar_lea.vmem %s0, %s386
      %s388 = smul.u32 16, %s26
      %s389 = smul.u32 16, %s26
      %p390 = scmp.lt.s32.totalorder %s25, 1
      %s391 = scalar_select %p390, %s25, 1
      %p392 = scmp.lt.s32.totalorder %s389, 31
      %s393 = scalar_select %p392, %s389, 31
      %s394 = smul.addr %s391, 32
      %s395 = sadd.s32 %s393, %s394
      %s396 = smul.addr %s395, 4
      %s397 = scalar_lea.vmem %s7, %s396
      %s398 = smul.u32 16, %s26
      %s399 = smul.u32 16, %s26
      %p400 = scmp.lt.s32.totalorder %s25, 1
      %s401 = scalar_select %p400, %s25, 1
      %p402 = scmp.lt.s32.totalorder %s399, 31
      %s403 = scalar_select %p402, %s399, 31
      %s404 = smul.addr %s401, 32
      %s405 = sadd.s32 %s403, %s404
      %s406 = smul.addr %s405, 4
      %s407 = scalar_lea.vmem %s8, %s406
      %s408 = smul.u32 16, %s26
      %s409 = smul.u32 16, %s26
      %p410 = scmp.lt.s32.totalorder %s25, 1
      %s411 = scalar_select %p410, %s25, 1
      %p412 = scmp.lt.s32.totalorder %s409, 31
      %s413 = scalar_select %p412, %s409, 31
      %s414 = smul.addr %s411, 32
      %s415 = sadd.s32 %s413, %s414
      %s416 = smul.addr %s415, 4
      %s417 = scalar_lea.vmem %s9, %s416
      %s418 = smul.u32 16, %s26
      %v420 = vld [vmem:[%s387] sm:$0xff]
      %v421 = vld [vmem:[%s387 + $0x8] sm:$0xff]
      %v422 = vld [vmem:[%s387 + $0x10] sm:$0xff]
      %v423 = vld [vmem:[%s387 + $0x18] sm:$0xff]
      %v424 = vld [vmem:[%s387 + $0x20] sm:$0xff]
      %v425 = vld [vmem:[%s387 + $0x28] sm:$0xff]
      %v426 = vld [vmem:[%s387 + $0x30] sm:$0xff]
      %v427 = vld [vmem:[%s387 + $0x38] sm:$0xff]
      %v428 = vld [vmem:[%s387 + $0x40] sm:$0xff]
      %v429 = vld [vmem:[%s387 + $0x48] sm:$0xff]
      %v430 = vld [vmem:[%s387 + $0x50] sm:$0xff]
      %v431 = vld [vmem:[%s387 + $0x58] sm:$0xff]
      %v432 = vld [vmem:[%s387 + $0x60] sm:$0xff]
      %v433 = vld [vmem:[%s387 + $0x68] sm:$0xff]
      %v434 = vld [vmem:[%s387 + $0x70] sm:$0xff]
      %v435 = vld [vmem:[%s387 + $0x78] sm:$0xff]
      %v436 = vld [vmem:[%s1] sm:$0x7]
      %438 = vset.pattern.permute.xlu0 0
      %439 = vperm.xlu0 %438, %v420
      %v440 = vpop.permute.xlu0 %439
      %443 = vset.pattern.permute.xlu0 0
      %444 = vperm.xlu0 %443, %v421
      %v445 = vpop.permute.xlu0 %444
      %448 = vset.pattern.permute.xlu0 0
      %449 = vperm.xlu0 %448, %v422
      %v450 = vpop.permute.xlu0 %449
      %453 = vset.pattern.permute.xlu0 0
      %454 = vperm.xlu0 %453, %v423
      %v455 = vpop.permute.xlu0 %454
      %458 = vset.pattern.permute.xlu0 0
      %459 = vperm.xlu0 %458, %v424
      %v460 = vpop.permute.xlu0 %459
      %463 = vset.pattern.permute.xlu0 0
      %464 = vperm.xlu0 %463, %v425
      %v465 = vpop.permute.xlu0 %464
      %468 = vset.pattern.permute.xlu0 0
      %469 = vperm.xlu0 %468, %v426
      %v470 = vpop.permute.xlu0 %469
      %473 = vset.pattern.permute.xlu0 0
      %474 = vperm.xlu0 %473, %v427
      %v475 = vpop.permute.xlu0 %474
      %478 = vset.pattern.permute.xlu0 0
      %479 = vperm.xlu0 %478, %v428
      %v480 = vpop.permute.xlu0 %479
      %483 = vset.pattern.permute.xlu0 0
      %484 = vperm.xlu0 %483, %v429
      %v485 = vpop.permute.xlu0 %484
      %488 = vset.pattern.permute.xlu0 0
      %489 = vperm.xlu0 %488, %v430
      %v490 = vpop.permute.xlu0 %489
      %493 = vset.pattern.permute.xlu0 0
      %494 = vperm.xlu0 %493, %v431
      %v495 = vpop.permute.xlu0 %494
      %498 = vset.pattern.permute.xlu0 0
      %499 = vperm.xlu0 %498, %v432
      %v500 = vpop.permute.xlu0 %499
      %503 = vset.pattern.permute.xlu0 0
      %504 = vperm.xlu0 %503, %v433
      %v505 = vpop.permute.xlu0 %504
      %508 = vset.pattern.permute.xlu0 0
      %509 = vperm.xlu0 %508, %v434
      %v510 = vpop.permute.xlu0 %509
      %513 = vset.pattern.permute.xlu0 0
      %514 = vperm.xlu0 %513, %v435
      %v515 = vpop.permute.xlu0 %514
      %v517 = vlaneseq
      %v518 = vshrl.u32 %v517, 7
      %v519 = vsub.s32 0, %v518
      %v520 = vrot.slane %v436, %v519
      %v521 = vmul.f32 %v440, %v520
      %v522 = vmul.f32 %v445, %v520
      %v523 = vmul.f32 %v450, %v520
      %v524 = vmul.f32 %v455, %v520
      %v525 = vmul.f32 %v460, %v520
      %v526 = vmul.f32 %v465, %v520
      %v527 = vmul.f32 %v470, %v520
      %v528 = vmul.f32 %v475, %v520
      %v529 = vmul.f32 %v480, %v520
      %v530 = vmul.f32 %v485, %v520
      %v531 = vmul.f32 %v490, %v520
      %v532 = vmul.f32 %v495, %v520
      %v533 = vmul.f32 %v500, %v520
      %v534 = vmul.f32 %v505, %v520
      %v535 = vmul.f32 %v510, %v520
      %v536 = vmul.f32 %v515, %v520
      %537 = vset.pattern.permute.xlu0 1
      %538 = vperm.xlu0 %537, %v420
      %v539 = vpop.permute.xlu0 %538
      %541 = vset.pattern.permute.xlu0 1
      %542 = vperm.xlu0 %541, %v421
      %v543 = vpop.permute.xlu0 %542
      %545 = vset.pattern.permute.xlu0 1
      %546 = vperm.xlu0 %545, %v422
      %v547 = vpop.permute.xlu0 %546
      %549 = vset.pattern.permute.xlu0 1
      %550 = vperm.xlu0 %549, %v423
      %v551 = vpop.permute.xlu0 %550
      %553 = vset.pattern.permute.xlu0 1
      %554 = vperm.xlu0 %553, %v424
      %v555 = vpop.permute.xlu0 %554
      %557 = vset.pattern.permute.xlu0 1
      %558 = vperm.xlu0 %557, %v425
      %v559 = vpop.permute.xlu0 %558
      %561 = vset.pattern.permute.xlu0 1
      %562 = vperm.xlu0 %561, %v426
      %v563 = vpop.permute.xlu0 %562
      %565 = vset.pattern.permute.xlu0 1
      %566 = vperm.xlu0 %565, %v427
      %v567 = vpop.permute.xlu0 %566
      %569 = vset.pattern.permute.xlu0 1
      %570 = vperm.xlu0 %569, %v428
      %v571 = vpop.permute.xlu0 %570
      %573 = vset.pattern.permute.xlu0 1
      %574 = vperm.xlu0 %573, %v429
      %v575 = vpop.permute.xlu0 %574
      %577 = vset.pattern.permute.xlu0 1
      %578 = vperm.xlu0 %577, %v430
      %v579 = vpop.permute.xlu0 %578
      %581 = vset.pattern.permute.xlu0 1
      %582 = vperm.xlu0 %581, %v431
      %v583 = vpop.permute.xlu0 %582
      %585 = vset.pattern.permute.xlu0 1
      %586 = vperm.xlu0 %585, %v432
      %v587 = vpop.permute.xlu0 %586
      %589 = vset.pattern.permute.xlu0 1
      %590 = vperm.xlu0 %589, %v433
      %v591 = vpop.permute.xlu0 %590
      %593 = vset.pattern.permute.xlu0 1
      %594 = vperm.xlu0 %593, %v434
      %v595 = vpop.permute.xlu0 %594
      %597 = vset.pattern.permute.xlu0 1
      %598 = vperm.xlu0 %597, %v435
      %v599 = vpop.permute.xlu0 %598
      %v601 = vlaneseq
      %v602 = vshrl.u32 %v601, 7
      %v603 = vsub.s32 1, %v602
      %v604 = vrot.slane %v436, %v603
      %v605 = vmul.f32 %v539, %v604
      %v606 = vmul.f32 %v543, %v604
      %v607 = vmul.f32 %v547, %v604
      %v608 = vmul.f32 %v551, %v604
      %v609 = vmul.f32 %v555, %v604
      %v610 = vmul.f32 %v559, %v604
      %v611 = vmul.f32 %v563, %v604
      %v612 = vmul.f32 %v567, %v604
      %v613 = vmul.f32 %v571, %v604
      %v614 = vmul.f32 %v575, %v604
      %v615 = vmul.f32 %v579, %v604
      %v616 = vmul.f32 %v583, %v604
      %v617 = vmul.f32 %v587, %v604
      %v618 = vmul.f32 %v591, %v604
      %v619 = vmul.f32 %v595, %v604
      %v620 = vmul.f32 %v599, %v604
      %v621 = vadd.f32 %v521, %v605
      %v622 = vadd.f32 %v522, %v606
      %v623 = vadd.f32 %v523, %v607
      %v624 = vadd.f32 %v524, %v608
      %v625 = vadd.f32 %v525, %v609
      %v626 = vadd.f32 %v526, %v610
      %v627 = vadd.f32 %v527, %v611
      %v628 = vadd.f32 %v528, %v612
      %v629 = vadd.f32 %v529, %v613
      %v630 = vadd.f32 %v530, %v614
      %v631 = vadd.f32 %v531, %v615
      %v632 = vadd.f32 %v532, %v616
      %v633 = vadd.f32 %v533, %v617
      %v634 = vadd.f32 %v534, %v618
      %v635 = vadd.f32 %v535, %v619
      %v636 = vadd.f32 %v536, %v620
      %637 = vset.pattern.permute.xlu0 2
      %638 = vperm.xlu0 %637, %v420
      %v639 = vpop.permute.xlu0 %638
      %641 = vset.pattern.permute.xlu0 2
      %642 = vperm.xlu0 %641, %v421
      %v643 = vpop.permute.xlu0 %642
      %645 = vset.pattern.permute.xlu0 2
      %646 = vperm.xlu0 %645, %v422
      %v647 = vpop.permute.xlu0 %646
      %649 = vset.pattern.permute.xlu0 2
      %650 = vperm.xlu0 %649, %v423
      %v651 = vpop.permute.xlu0 %650
      %653 = vset.pattern.permute.xlu0 2
      %654 = vperm.xlu0 %653, %v424
      %v655 = vpop.permute.xlu0 %654
      %657 = vset.pattern.permute.xlu0 2
      %658 = vperm.xlu0 %657, %v425
      %v659 = vpop.permute.xlu0 %658
      %661 = vset.pattern.permute.xlu0 2
      %662 = vperm.xlu0 %661, %v426
      %v663 = vpop.permute.xlu0 %662
      %665 = vset.pattern.permute.xlu0 2
      %666 = vperm.xlu0 %665, %v427
      %v667 = vpop.permute.xlu0 %666
      %669 = vset.pattern.permute.xlu0 2
      %670 = vperm.xlu0 %669, %v428
      %v671 = vpop.permute.xlu0 %670
      %673 = vset.pattern.permute.xlu0 2
      %674 = vperm.xlu0 %673, %v429
      %v675 = vpop.permute.xlu0 %674
      %677 = vset.pattern.permute.xlu0 2
      %678 = vperm.xlu0 %677, %v430
      %v679 = vpop.permute.xlu0 %678
      %681 = vset.pattern.permute.xlu0 2
      %682 = vperm.xlu0 %681, %v431
      %v683 = vpop.permute.xlu0 %682
      %685 = vset.pattern.permute.xlu0 2
      %686 = vperm.xlu0 %685, %v432
      %v687 = vpop.permute.xlu0 %686
      %689 = vset.pattern.permute.xlu0 2
      %690 = vperm.xlu0 %689, %v433
      %v691 = vpop.permute.xlu0 %690
      %693 = vset.pattern.permute.xlu0 2
      %694 = vperm.xlu0 %693, %v434
      %v695 = vpop.permute.xlu0 %694
      %697 = vset.pattern.permute.xlu0 2
      %698 = vperm.xlu0 %697, %v435
      %v699 = vpop.permute.xlu0 %698
      %v701 = vlaneseq
      %v702 = vshrl.u32 %v701, 7
      %v703 = vsub.s32 2, %v702
      %v704 = vrot.slane %v436, %v703
      %v705 = vmul.f32 %v639, %v704
      %v706 = vmul.f32 %v643, %v704
      %v707 = vmul.f32 %v647, %v704
      %v708 = vmul.f32 %v651, %v704
      %v709 = vmul.f32 %v655, %v704
      %v710 = vmul.f32 %v659, %v704
      %v711 = vmul.f32 %v663, %v704
      %v712 = vmul.f32 %v667, %v704
      %v713 = vmul.f32 %v671, %v704
      %v714 = vmul.f32 %v675, %v704
      %v715 = vmul.f32 %v679, %v704
      %v716 = vmul.f32 %v683, %v704
      %v717 = vmul.f32 %v687, %v704
      %v718 = vmul.f32 %v691, %v704
      %v719 = vmul.f32 %v695, %v704
      %v720 = vmul.f32 %v699, %v704
      %v721 = vadd.f32 %v621, %v705
      %v722 = vadd.f32 %v622, %v706
      %v723 = vadd.f32 %v623, %v707
      %v724 = vadd.f32 %v624, %v708
      %v725 = vadd.f32 %v625, %v709
      %v726 = vadd.f32 %v626, %v710
      %v727 = vadd.f32 %v627, %v711
      %v728 = vadd.f32 %v628, %v712
      %v729 = vadd.f32 %v629, %v713
      %v730 = vadd.f32 %v630, %v714
      %v731 = vadd.f32 %v631, %v715
      %v732 = vadd.f32 %v632, %v716
      %v733 = vadd.f32 %v633, %v717
      %v734 = vadd.f32 %v634, %v718
      %v735 = vadd.f32 %v635, %v719
      %v736 = vadd.f32 %v636, %v720
      %v737 = vld [vmem:[%s2] sm:$0x1]
      %v739 = vlaneseq
      %v740 = vshrl.u32 %v739, 7
      %v741 = vsub.s32 0, %v740
      %v742 = vrot.slane %v737, %v741
      %v744 = vadd.f32 %v721, %v742
      %v745 = vadd.f32 %v722, %v742
      %v746 = vadd.f32 %v723, %v742
      %v747 = vadd.f32 %v724, %v742
      %v748 = vadd.f32 %v725, %v742
      %v749 = vadd.f32 %v726, %v742
      %v750 = vadd.f32 %v727, %v742
      %v751 = vadd.f32 %v728, %v742
      %v752 = vadd.f32 %v729, %v742
      %v753 = vadd.f32 %v730, %v742
      %v754 = vadd.f32 %v731, %v742
      %v755 = vadd.f32 %v732, %v742
      %v756 = vadd.f32 %v733, %v742
      %v757 = vadd.f32 %v734, %v742
      %v758 = vadd.f32 %v735, %v742
      %v759 = vadd.f32 %v736, %v742
      %v760 = vmax.f32 %v744, 0.0
      %v761 = vmax.f32 %v745, 0.0
      %v762 = vmax.f32 %v746, 0.0
      %v763 = vmax.f32 %v747, 0.0
      %v764 = vmax.f32 %v748, 0.0
      %v765 = vmax.f32 %v749, 0.0
      %v766 = vmax.f32 %v750, 0.0
      %v767 = vmax.f32 %v751, 0.0
      %v768 = vmax.f32 %v752, 0.0
      %v769 = vmax.f32 %v753, 0.0
      %v770 = vmax.f32 %v754, 0.0
      %v771 = vmax.f32 %v755, 0.0
      %v772 = vmax.f32 %v756, 0.0
      %v773 = vmax.f32 %v757, 0.0
      %v774 = vmax.f32 %v758, 0.0
      %v775 = vmax.f32 %v759, 0.0
      %v776 = vpack.c.bf16 %v761, %v760
      %v777 = vpack.c.bf16 %v763, %v762
      %v778 = vpack.c.bf16 %v765, %v764
      %v779 = vpack.c.bf16 %v767, %v766
      %v780 = vpack.c.bf16 %v769, %v768
      %v781 = vpack.c.bf16 %v771, %v770
      %v782 = vpack.c.bf16 %v773, %v772
      %v783 = vpack.c.bf16 %v775, %v774
      %v784 = vld [vmem:[%s3] sm:$0xf]
      %v785 = vld [vmem:[%s3 + $0x4] sm:$0xf]
      %v786 = vld [vmem:[%s3 + $0x8] sm:$0xf]
      %v787 = vld [vmem:[%s3 + $0xc] sm:$0xf]
      %v788 = vld [vmem:[%s4] sm:$0x1]
      %v790 = vlaneseq
      %v791 = vshrl.u32 %v790, 7
      %v792 = vsub.s32 0, %v791
      %v793 = vrot.slane %v788, %v792
      %v799 = vunpack.c.l.b16 %v784
      %v800 = vunpack.c.l.b16 %v785
      %v801 = vunpack.c.l.b16 %v786
      %v802 = vunpack.c.l.b16 %v787
      %v803 = vpack.c.b16 %v800, %v799
      %v804 = vpack.c.b16 %v802, %v801
      %vm807 = vcmask 261120
      %v809 = vsel %vm807, %v776, 0
      %v812 = vsel %vm807, %v777, 0
      %v815 = vsel %vm807, %v778, 0
      %v818 = vsel %vm807, %v779, 0
      %v821 = vsel %vm807, %v780, 0
      %v824 = vsel %vm807, %v781, 0
      %v827 = vsel %vm807, %v782, 0
      %v830 = vsel %vm807, %v783, 0
      %832 = vmatprep.subr.bf16.mxu0 0
      %833 = vmatpush1.bf16.msra.mxu0 0
      %834 = vmatprep.subr.bf16.mxu0 0
      %835 = vmatpush1.bf16.msra.mxu0 0
      %836 = vmatprep.subr.bf16.mxu0 0
      %837 = vmatpush1.bf16.msra.mxu0 0
      %838 = vmatprep.subr.bf16.mxu0 0
      %839 = vmatpush1.bf16.msra.mxu0 0
      %840 = vmatprep.subr.bf16.mxu0 0
      %841 = vmatpush1.bf16.msra.mxu0 0
      %842 = vmatprep.subr.bf16.mxu0 0
      %843 = vmatpush1.bf16.msra.mxu0 0
      %844 = vmatprep.subr.bf16.mxu0 0
      %845 = vmatpush1.bf16.msra.mxu0 %v804
      %846 = vmatprep.subr.bf16.mxu0 0
      %847 = vmatpush1.bf16.msra.mxu0 %v803
      %848 = vmatprep.subr.bf16.mxu0 0
      %849 = vmatpush2.bf16.msra.mxu0 0
      %850 = vmatprep.subr.bf16.mxu0 0
      %851 = vmatpush2.bf16.msra.mxu0 0
      %852 = vmatprep.subr.bf16.mxu0 0
      %853 = vmatpush2.bf16.msra.mxu0 0
      %854 = vmatprep.subr.bf16.mxu0 0
      %855 = vmatpush2.bf16.msra.mxu0 0
      %856 = vmatprep.subr.bf16.mxu0 0
      %857 = vmatpush2.bf16.msra.mxu0 0
      %858 = vmatprep.subr.bf16.mxu0 0
      %859 = vmatpush2.bf16.msra.mxu0 0
      %860 = vmatprep.subr.bf16.mxu0 0
      %861 = vmatpush2.bf16.msra.mxu0 0
      %862 = vmatprep.subr.bf16.mxu0 0
      %863 = vmatpush2.bf16.msra.mxu0 0
      %864 = vmatprep.mubr.bf16.mxu0 0
      %865 = vmatmul.mubr.bf16.gmra.mxu0 %v809
      %v866 = vpop.f32.mrf.mxu0
      %v867 = vadd.f32 %v793, %v866
      %v868 = vpop.f32.mrf.mxu0
      %v869 = vpop.f32.mrf.mxu0
      %v870 = vadd.f32 %v793, %v869
      %v871 = vpop.f32.mrf.mxu0
      %872 = vmatprep.mubr.bf16.mxu0 0
      %873 = vmatmul.mubr.bf16.gmra.mxu0 %v812
      %v874 = vpop.f32.mrf.mxu0
      %v875 = vadd.f32 %v793, %v874
      %v876 = vpop.f32.mrf.mxu0
      %v877 = vpop.f32.mrf.mxu0
      %v878 = vadd.f32 %v793, %v877
      %v879 = vpop.f32.mrf.mxu0
      %880 = vmatprep.mubr.bf16.mxu0 0
      %881 = vmatmul.mubr.bf16.gmra.mxu0 %v815
      %v882 = vpop.f32.mrf.mxu0
      %v883 = vadd.f32 %v793, %v882
      %v884 = vpop.f32.mrf.mxu0
      %v885 = vpop.f32.mrf.mxu0
      %v886 = vadd.f32 %v793, %v885
      %v887 = vpop.f32.mrf.mxu0
      %888 = vmatprep.mubr.bf16.mxu0 0
      %889 = vmatmul.mubr.bf16.gmra.mxu0 %v818
      %v890 = vpop.f32.mrf.mxu0
      %v891 = vadd.f32 %v793, %v890
      %v892 = vpop.f32.mrf.mxu0
      %v893 = vpop.f32.mrf.mxu0
      %v894 = vadd.f32 %v793, %v893
      %v895 = vpop.f32.mrf.mxu0
      %896 = vmatprep.mubr.bf16.mxu0 0
      %897 = vmatmul.mubr.bf16.gmra.mxu0 %v821
      %v898 = vpop.f32.mrf.mxu0
      %v899 = vadd.f32 %v793, %v898
      %v900 = vpop.f32.mrf.mxu0
      %v901 = vpop.f32.mrf.mxu0
      %v902 = vadd.f32 %v793, %v901
      %v903 = vpop.f32.mrf.mxu0
      %904 = vmatprep.mubr.bf16.mxu0 0
      %905 = vmatmul.mubr.bf16.gmra.mxu0 %v824
      %v906 = vpop.f32.mrf.mxu0
      %v907 = vadd.f32 %v793, %v906
      %v908 = vpop.f32.mrf.mxu0
      %v909 = vpop.f32.mrf.mxu0
      %v910 = vadd.f32 %v793, %v909
      %v911 = vpop.f32.mrf.mxu0
      %912 = vmatprep.mubr.bf16.mxu0 0
      %913 = vmatmul.mubr.bf16.gmra.mxu0 %v827
      %v914 = vpop.f32.mrf.mxu0
      %v915 = vadd.f32 %v793, %v914
      %v916 = vpop.f32.mrf.mxu0
      %v917 = vpop.f32.mrf.mxu0
      %v918 = vadd.f32 %v793, %v917
      %v919 = vpop.f32.mrf.mxu0
      %920 = vmatprep.mubr.bf16.mxu0 0
      %921 = vmatmul.mubr.bf16.gmra.mxu0 %v830
      %v922 = vpop.f32.mrf.mxu0
      %v923 = vadd.f32 %v793, %v922
      %v924 = vpop.f32.mrf.mxu0
      %v925 = vpop.f32.mrf.mxu0
      %v926 = vadd.f32 %v793, %v925
      %v927 = vpop.f32.mrf.mxu0
      %928 = vdwg.mxu0
      %v929 = vmax.f32 %v867, 0.0
      %v930 = vmax.f32 %v870, 0.0
      %v931 = vmax.f32 %v875, 0.0
      %v932 = vmax.f32 %v878, 0.0
      %v933 = vmax.f32 %v883, 0.0
      %v934 = vmax.f32 %v886, 0.0
      %v935 = vmax.f32 %v891, 0.0
      %v936 = vmax.f32 %v894, 0.0
      %v937 = vmax.f32 %v899, 0.0
      %v938 = vmax.f32 %v902, 0.0
      %v939 = vmax.f32 %v907, 0.0
      %v940 = vmax.f32 %v910, 0.0
      %v941 = vmax.f32 %v915, 0.0
      %v942 = vmax.f32 %v918, 0.0
      %v943 = vmax.f32 %v923, 0.0
      %v944 = vmax.f32 %v926, 0.0
      %v945 = vpack.c.bf16 %v930, %v929
      %v946 = vpack.c.bf16 %v932, %v931
      %v947 = vpack.c.bf16 %v934, %v933
      %v948 = vpack.c.bf16 %v936, %v935
      %v949 = vpack.c.bf16 %v938, %v937
      %v950 = vpack.c.bf16 %v940, %v939
      %v951 = vpack.c.bf16 %v942, %v941
      %v952 = vpack.c.bf16 %v944, %v943
      %v961 = vunpack.c.l.b16 %v945
      %v962 = vunpack.c.h.b16 %v945
      %v963 = vunpack.c.l.b16 %v946
      %v964 = vunpack.c.h.b16 %v946
      %v965 = vunpack.c.l.b16 %v947
      %v966 = vunpack.c.h.b16 %v947
      %v967 = vunpack.c.l.b16 %v948
      %v968 = vunpack.c.h.b16 %v948
      %v969 = vunpack.c.l.b16 %v949
      %v970 = vunpack.c.h.b16 %v949
      %v971 = vunpack.c.l.b16 %v950
      %v972 = vunpack.c.h.b16 %v950
      %v973 = vunpack.c.l.b16 %v951
      %v974 = vunpack.c.h.b16 %v951
      %v975 = vunpack.c.l.b16 %v952
      %v976 = vunpack.c.h.b16 %v952
      %v977 = vpack.c.b16 %v961, %v961
      %v978 = vpack.c.b16 %v962, %v962
      %v979 = vpack.c.b16 %v963, %v963
      %v980 = vpack.c.b16 %v964, %v964
      %v981 = vpack.c.b16 %v965, %v965
      %v982 = vpack.c.b16 %v966, %v966
      %v983 = vpack.c.b16 %v967, %v967
      %v984 = vpack.c.b16 %v968, %v968
      %v985 = vpack.c.b16 %v969, %v969
      %v986 = vpack.c.b16 %v970, %v970
      %v987 = vpack.c.b16 %v971, %v971
      %v988 = vpack.c.b16 %v972, %v972
      %v989 = vpack.c.b16 %v973, %v973
      %v990 = vpack.c.b16 %v974, %v974
      %v991 = vpack.c.b16 %v975, %v975
      %v992 = vpack.c.b16 %v976, %v976
      %vm1009 = vcmask 519168
      %1010 = vst.msk [vmem:[%s397] sm:$0xf] %vm1009, %v977
      %1011 = vst.msk [vmem:[%s397 + $0x4] sm:$0xf] %vm1009, %v978
      %1012 = vst.msk [vmem:[%s397 + $0x8] sm:$0xf] %vm1009, %v979
      %1013 = vst.msk [vmem:[%s397 + $0xc] sm:$0xf] %vm1009, %v980
      %1014 = vst.msk [vmem:[%s397 + $0x10] sm:$0xf] %vm1009, %v981
      %1015 = vst.msk [vmem:[%s397 + $0x14] sm:$0xf] %vm1009, %v982
      %1016 = vst.msk [vmem:[%s397 + $0x18] sm:$0xf] %vm1009, %v983
      %1017 = vst.msk [vmem:[%s397 + $0x1c] sm:$0xf] %vm1009, %v984
      %1018 = vst.msk [vmem:[%s397 + $0x20] sm:$0xf] %vm1009, %v985
      %1019 = vst.msk [vmem:[%s397 + $0x24] sm:$0xf] %vm1009, %v986
      %1020 = vst.msk [vmem:[%s397 + $0x28] sm:$0xf] %vm1009, %v987
      %1021 = vst.msk [vmem:[%s397 + $0x2c] sm:$0xf] %vm1009, %v988
      %1022 = vst.msk [vmem:[%s397 + $0x30] sm:$0xf] %vm1009, %v989
      %1023 = vst.msk [vmem:[%s397 + $0x34] sm:$0xf] %vm1009, %v990
      %1024 = vst.msk [vmem:[%s397 + $0x38] sm:$0xf] %vm1009, %v991
      %1025 = vst.msk [vmem:[%s397 + $0x3c] sm:$0xf] %vm1009, %v992
      %v1026 = vld [vmem:[%s5] sm:$0xf]
      %v1027 = vld [vmem:[%s5 + $0x4] sm:$0xf]
      %v1028 = vld [vmem:[%s5 + $0x8] sm:$0xf]
      %v1029 = vld [vmem:[%s5 + $0xc] sm:$0xf]
      %v1030 = vld [vmem:[%s5 + $0x10] sm:$0xf]
      %v1031 = vld [vmem:[%s5 + $0x14] sm:$0xf]
      %v1032 = vld [vmem:[%s5 + $0x18] sm:$0xf]
      %v1033 = vld [vmem:[%s5 + $0x1c] sm:$0xf]
      %v1034 = vld [vmem:[%s6] sm:$0x1]
      %v1036 = vlaneseq
      %v1037 = vshrl.u32 %v1036, 7
      %v1038 = vsub.s32 0, %v1037
      %v1039 = vrot.slane %v1034, %v1038
      %v1049 = vunpack.c.l.b16 %v1026
      %v1050 = vunpack.c.l.b16 %v1027
      %v1051 = vunpack.c.l.b16 %v1028
      %v1052 = vunpack.c.l.b16 %v1029
      %v1053 = vunpack.c.l.b16 %v1030
      %v1054 = vunpack.c.l.b16 %v1031
      %v1055 = vunpack.c.l.b16 %v1032
      %v1056 = vunpack.c.l.b16 %v1033
      %v1057 = vpack.c.b16 %v1050, %v1049
      %v1058 = vpack.c.b16 %v1052, %v1051
      %v1059 = vpack.c.b16 %v1054, %v1053
      %v1060 = vpack.c.b16 %v1056, %v1055
      %vm1065 = vcmask 523264
      %v1067 = vsel %vm1065, %v945, 0
      %v1070 = vsel %vm1065, %v946, 0
      %v1073 = vsel %vm1065, %v947, 0
      %v1076 = vsel %vm1065, %v948, 0
      %v1079 = vsel %vm1065, %v949, 0
      %v1082 = vsel %vm1065, %v950, 0
      %v1085 = vsel %vm1065, %v951, 0
      %v1088 = vsel %vm1065, %v952, 0
      %1090 = vmatprep.subr.bf16.mxu0 0
      %1091 = vmatpush1.bf16.msra.mxu0 0
      %1092 = vmatprep.subr.bf16.mxu0 0
      %1093 = vmatpush1.bf16.msra.mxu0 0
      %1094 = vmatprep.subr.bf16.mxu0 0
      %1095 = vmatpush1.bf16.msra.mxu0 0
      %1096 = vmatprep.subr.bf16.mxu0 0
      %1097 = vmatpush1.bf16.msra.mxu0 0
      %1098 = vmatprep.subr.bf16.mxu0 0
      %1099 = vmatpush1.bf16.msra.mxu0 %v1060
      %1100 = vmatprep.subr.bf16.mxu0 0
      %1101 = vmatpush1.bf16.msra.mxu0 %v1059
      %1102 = vmatprep.subr.bf16.mxu0 0
      %1103 = vmatpush1.bf16.msra.mxu0 %v1058
      %1104 = vmatprep.subr.bf16.mxu0 0
      %1105 = vmatpush1.bf16.msra.mxu0 %v1057
      %1106 = vmatprep.subr.bf16.mxu0 0
      %1107 = vmatpush2.bf16.msra.mxu0 0
      %1108 = vmatprep.subr.bf16.mxu0 0
      %1109 = vmatpush2.bf16.msra.mxu0 0
      %1110 = vmatprep.subr.bf16.mxu0 0
      %1111 = vmatpush2.bf16.msra.mxu0 0
      %1112 = vmatprep.subr.bf16.mxu0 0
      %1113 = vmatpush2.bf16.msra.mxu0 0
      %1114 = vmatprep.subr.bf16.mxu0 0
      %1115 = vmatpush2.bf16.msra.mxu0 0
      %1116 = vmatprep.subr.bf16.mxu0 0
      %1117 = vmatpush2.bf16.msra.mxu0 0
      %1118 = vmatprep.subr.bf16.mxu0 0
      %1119 = vmatpush2.bf16.msra.mxu0 0
      %1120 = vmatprep.subr.bf16.mxu0 0
      %1121 = vmatpush2.bf16.msra.mxu0 0
      %1122 = vmatprep.mubr.bf16.mxu0 0
      %1123 = vmatmul.mubr.bf16.gmra.mxu0 %v1067
      %v1124 = vpop.f32.mrf.mxu0
      %v1125 = vadd.f32 %v1039, %v1124
      %v1126 = vpop.f32.mrf.mxu0
      %v1127 = vpop.f32.mrf.mxu0
      %v1128 = vadd.f32 %v1039, %v1127
      %v1129 = vpop.f32.mrf.mxu0
      %1130 = vmatprep.mubr.bf16.mxu0 0
      %1131 = vmatmul.mubr.bf16.gmra.mxu0 %v1070
      %v1132 = vpop.f32.mrf.mxu0
      %v1133 = vadd.f32 %v1039, %v1132
      %v1134 = vpop.f32.mrf.mxu0
      %v1135 = vpop.f32.mrf.mxu0
      %v1136 = vadd.f32 %v1039, %v1135
      %v1137 = vpop.f32.mrf.mxu0
      %1138 = vmatprep.mubr.bf16.mxu0 0
      %1139 = vmatmul.mubr.bf16.gmra.mxu0 %v1073
      %v1140 = vpop.f32.mrf.mxu0
      %v1141 = vadd.f32 %v1039, %v1140
      %v1142 = vpop.f32.mrf.mxu0
      %v1143 = vpop.f32.mrf.mxu0
      %v1144 = vadd.f32 %v1039, %v1143
      %v1145 = vpop.f32.mrf.mxu0
      %1146 = vmatprep.mubr.bf16.mxu0 0
      %1147 = vmatmul.mubr.bf16.gmra.mxu0 %v1076
      %v1148 = vpop.f32.mrf.mxu0
      %v1149 = vadd.f32 %v1039, %v1148
      %v1150 = vpop.f32.mrf.mxu0
      %v1151 = vpop.f32.mrf.mxu0
      %v1152 = vadd.f32 %v1039, %v1151
      %v1153 = vpop.f32.mrf.mxu0
      %1154 = vmatprep.mubr.bf16.mxu0 0
      %1155 = vmatmul.mubr.bf16.gmra.mxu0 %v1079
      %v1156 = vpop.f32.mrf.mxu0
      %v1157 = vadd.f32 %v1039, %v1156
      %v1158 = vpop.f32.mrf.mxu0
      %v1159 = vpop.f32.mrf.mxu0
      %v1160 = vadd.f32 %v1039, %v1159
      %v1161 = vpop.f32.mrf.mxu0
      %1162 = vmatprep.mubr.bf16.mxu0 0
      %1163 = vmatmul.mubr.bf16.gmra.mxu0 %v1082
      %v1164 = vpop.f32.mrf.mxu0
      %v1165 = vadd.f32 %v1039, %v1164
      %v1166 = vpop.f32.mrf.mxu0
      %v1167 = vpop.f32.mrf.mxu0
      %v1168 = vadd.f32 %v1039, %v1167
      %v1169 = vpop.f32.mrf.mxu0
      %1170 = vmatprep.mubr.bf16.mxu0 0
      %1171 = vmatmul.mubr.bf16.gmra.mxu0 %v1085
      %v1172 = vpop.f32.mrf.mxu0
      %v1173 = vadd.f32 %v1039, %v1172
      %v1174 = vpop.f32.mrf.mxu0
      %v1175 = vpop.f32.mrf.mxu0
      %v1176 = vadd.f32 %v1039, %v1175
      %v1177 = vpop.f32.mrf.mxu0
      %1178 = vmatprep.mubr.bf16.mxu0 0
      %1179 = vmatmul.mubr.bf16.gmra.mxu0 %v1088
      %v1180 = vpop.f32.mrf.mxu0
      %v1181 = vadd.f32 %v1039, %v1180
      %v1182 = vpop.f32.mrf.mxu0
      %v1183 = vpop.f32.mrf.mxu0
      %v1184 = vadd.f32 %v1039, %v1183
      %v1185 = vpop.f32.mrf.mxu0
      %1186 = vdwg.mxu0
      %v1187 = vpack.c.bf16 %v1128, %v1125
      %v1188 = vpack.c.bf16 %v1136, %v1133
      %v1189 = vpack.c.bf16 %v1144, %v1141
      %v1190 = vpack.c.bf16 %v1152, %v1149
      %v1191 = vpack.c.bf16 %v1160, %v1157
      %v1192 = vpack.c.bf16 %v1168, %v1165
      %v1193 = vpack.c.bf16 %v1176, %v1173
      %v1194 = vpack.c.bf16 %v1184, %v1181
      %v1203 = vunpack.c.l.b16 %v1187
      %v1204 = vunpack.c.h.b16 %v1187
      %v1205 = vunpack.c.l.b16 %v1188
      %v1206 = vunpack.c.h.b16 %v1188
      %v1207 = vunpack.c.l.b16 %v1189
      %v1208 = vunpack.c.h.b16 %v1189
      %v1209 = vunpack.c.l.b16 %v1190
      %v1210 = vunpack.c.h.b16 %v1190
      %v1211 = vunpack.c.l.b16 %v1191
      %v1212 = vunpack.c.h.b16 %v1191
      %v1213 = vunpack.c.l.b16 %v1192
      %v1214 = vunpack.c.h.b16 %v1192
      %v1215 = vunpack.c.l.b16 %v1193
      %v1216 = vunpack.c.h.b16 %v1193
      %v1217 = vunpack.c.l.b16 %v1194
      %v1218 = vunpack.c.h.b16 %v1194
      %v1219 = vpack.c.b16 %v1203, %v1203
      %v1220 = vpack.c.b16 %v1204, %v1204
      %v1221 = vpack.c.b16 %v1205, %v1205
      %v1222 = vpack.c.b16 %v1206, %v1206
      %v1223 = vpack.c.b16 %v1207, %v1207
      %v1224 = vpack.c.b16 %v1208, %v1208
      %v1225 = vpack.c.b16 %v1209, %v1209
      %v1226 = vpack.c.b16 %v1210, %v1210
      %v1227 = vpack.c.b16 %v1211, %v1211
      %v1228 = vpack.c.b16 %v1212, %v1212
      %v1229 = vpack.c.b16 %v1213, %v1213
      %v1230 = vpack.c.b16 %v1214, %v1214
      %v1231 = vpack.c.b16 %v1215, %v1215
      %v1232 = vpack.c.b16 %v1216, %v1216
      %v1233 = vpack.c.b16 %v1217, %v1217
      %v1234 = vpack.c.b16 %v1218, %v1218
      %1251 = vst.msk [vmem:[%s407] sm:$0xf] %vm1009, %v1219
      %1252 = vst.msk [vmem:[%s407 + $0x4] sm:$0xf] %vm1009, %v1220
      %1253 = vst.msk [vmem:[%s407 + $0x8] sm:$0xf] %vm1009, %v1221
      %1254 = vst.msk [vmem:[%s407 + $0xc] sm:$0xf] %vm1009, %v1222
      %1255 = vst.msk [vmem:[%s407 + $0x10] sm:$0xf] %vm1009, %v1223
      %1256 = vst.msk [vmem:[%s407 + $0x14] sm:$0xf] %vm1009, %v1224
      %1257 = vst.msk [vmem:[%s407 + $0x18] sm:$0xf] %vm1009, %v1225
      %1258 = vst.msk [vmem:[%s407 + $0x1c] sm:$0xf] %vm1009, %v1226
      %1259 = vst.msk [vmem:[%s407 + $0x20] sm:$0xf] %vm1009, %v1227
      %1260 = vst.msk [vmem:[%s407 + $0x24] sm:$0xf] %vm1009, %v1228
      %1261 = vst.msk [vmem:[%s407 + $0x28] sm:$0xf] %vm1009, %v1229
      %1262 = vst.msk [vmem:[%s407 + $0x2c] sm:$0xf] %vm1009, %v1230
      %1263 = vst.msk [vmem:[%s407 + $0x30] sm:$0xf] %vm1009, %v1231
      %1264 = vst.msk [vmem:[%s407 + $0x34] sm:$0xf] %vm1009, %v1232
      %1265 = vst.msk [vmem:[%s407 + $0x38] sm:$0xf] %vm1009, %v1233
      %1266 = vst.msk [vmem:[%s407 + $0x3c] sm:$0xf] %vm1009, %v1234
      %1267 = vrot.lane.b32.xlu0 %v1219, 64
      %v1268 = vpop.permute.xlu0 %1267
      %1269 = vrot.lane.b32.xlu0 %v1220, 64
      %v1270 = vpop.permute.xlu0 %1269
      %1271 = vrot.lane.b32.xlu0 %v1221, 64
      %v1272 = vpop.permute.xlu0 %1271
      %1273 = vrot.lane.b32.xlu0 %v1222, 64
      %v1274 = vpop.permute.xlu0 %1273
      %1275 = vrot.lane.b32.xlu0 %v1223, 64
      %v1276 = vpop.permute.xlu0 %1275
      %1277 = vrot.lane.b32.xlu0 %v1224, 64
      %v1278 = vpop.permute.xlu0 %1277
      %1279 = vrot.lane.b32.xlu0 %v1225, 64
      %v1280 = vpop.permute.xlu0 %1279
      %1281 = vrot.lane.b32.xlu0 %v1226, 64
      %v1282 = vpop.permute.xlu0 %1281
      %1283 = vrot.lane.b32.xlu0 %v1227, 64
      %v1284 = vpop.permute.xlu0 %1283
      %1285 = vrot.lane.b32.xlu0 %v1228, 64
      %v1286 = vpop.permute.xlu0 %1285
      %1287 = vrot.lane.b32.xlu0 %v1229, 64
      %v1288 = vpop.permute.xlu0 %1287
      %1289 = vrot.lane.b32.xlu0 %v1230, 64
      %v1290 = vpop.permute.xlu0 %1289
      %1291 = vrot.lane.b32.xlu0 %v1231, 64
      %v1292 = vpop.permute.xlu0 %1291
      %1293 = vrot.lane.b32.xlu0 %v1232, 64
      %v1294 = vpop.permute.xlu0 %1293
      %1295 = vrot.lane.b32.xlu0 %v1233, 64
      %v1296 = vpop.permute.xlu0 %1295
      %1297 = vrot.lane.b32.xlu0 %v1234, 64
      %v1298 = vpop.permute.xlu0 %1297
      %1315 = vst.msk [vmem:[%s417] sm:$0xf] %vm1009, %v1268
      %1316 = vst.msk [vmem:[%s417 + $0x4] sm:$0xf] %vm1009, %v1270
      %1317 = vst.msk [vmem:[%s417 + $0x8] sm:$0xf] %vm1009, %v1272
      %1318 = vst.msk [vmem:[%s417 + $0xc] sm:$0xf] %vm1009, %v1274
      %1319 = vst.msk [vmem:[%s417 + $0x10] sm:$0xf] %vm1009, %v1276
      %1320 = vst.msk [vmem:[%s417 + $0x14] sm:$0xf] %vm1009, %v1278
      %1321 = vst.msk [vmem:[%s417 + $0x18] sm:$0xf] %vm1009, %v1280
      %1322 = vst.msk [vmem:[%s417 + $0x1c] sm:$0xf] %vm1009, %v1282
      %1323 = vst.msk [vmem:[%s417 + $0x20] sm:$0xf] %vm1009, %v1284
      %1324 = vst.msk [vmem:[%s417 + $0x24] sm:$0xf] %vm1009, %v1286
      %1325 = vst.msk [vmem:[%s417 + $0x28] sm:$0xf] %vm1009, %v1288
      %1326 = vst.msk [vmem:[%s417 + $0x2c] sm:$0xf] %vm1009, %v1290
      %1327 = vst.msk [vmem:[%s417 + $0x30] sm:$0xf] %vm1009, %v1292
      %1328 = vst.msk [vmem:[%s417 + $0x34] sm:$0xf] %vm1009, %v1294
      %1329 = vst.msk [vmem:[%s417 + $0x38] sm:$0xf] %vm1009, %v1296
      %1330 = vst.msk [vmem:[%s417 + $0x3c] sm:$0xf] %vm1009, %v1298
      %s1331 = smul.u32 16, %s26
      %p1332 = scmp.lt.s32.totalorder %s25, 1
      %s1333 = scalar_select %p1332, %s25, 1
      %p1334 = scmp.lt.s32.totalorder %s1331, 31
      %s1335 = scalar_select %p1334, %s1331, 31
      %s1336 = smul.addr %s1333, 32
      %s1337 = sadd.s32 %s1335, %s1336
      %s1338 = smul.addr %s1337, 4
      %s1339 = scalar_lea.vmem %s7, %s1338
      %s1340 = smul.u32 16, %s26
      %p1341 = scmp.lt.s32.totalorder %s25, 1
      %s1342 = scalar_select %p1341, %s25, 1
      %p1343 = scmp.lt.s32.totalorder %s1340, 31
      %s1344 = scalar_select %p1343, %s1340, 31
      %s1345 = smul.addr %s1342, 32
      %s1346 = sadd.s32 %s1344, %s1345
      %s1347 = smul.addr %s1346, 4
      %s1348 = scalar_lea.vmem %s8, %s1347
      %s1349 = smul.u32 16, %s26
      %p1350 = scmp.lt.s32.totalorder %s25, 1
      %s1351 = scalar_select %p1350, %s25, 1
      %p1352 = scmp.lt.s32.totalorder %s1349, 31
      %s1353 = scalar_select %p1352, %s1349, 31
      %s1354 = smul.addr %s1351, 32
      %s1355 = sadd.s32 %s1353, %s1354
      %s1356 = smul.addr %s1355, 4
      %s1357 = scalar_lea.vmem %s9, %s1356
      // Predicated region
      $region49: #{tpu_custom_call.1} parent=47 // pred_check
        %p1358 = pneg %p207
      $region50: #{tpu_custom_call.1} parent=47 // pred_check_branch
        %1360 = sbr.rel (%p1358) target = $region52
      $region51: #{tpu_custom_call.1} parent=47 // pred_region
        %s1361 = smul.u32 16, %s26
      $region52: #{tpu_custom_call.1} parent=47 // pred_fallthru
        _
      // Predicated region
      $region53: #{tpu_custom_call.1} parent=47 // pred_check
        %p1362 = pneg %p235
      $region54: #{tpu_custom_call.1} parent=47 // pred_check_branch
        %1364 = sbr.rel (%p1362) target = $region56
      $region55: #{tpu_custom_call.1} parent=47 // pred_region
        %s1365 = smul.u32 16, %s26
      $region56: #{tpu_custom_call.1} parent=47 // pred_fallthru
        _
      // Predicated region
      $region57: #{tpu_custom_call.1} parent=47 // pred_check
        %p1366 = pneg %p263
      $region58: #{tpu_custom_call.1} parent=47 // pred_check_branch
        %1368 = sbr.rel (%p1366) target = $region60
      $region59: #{tpu_custom_call.1} parent=47 // pred_region
        %s1369 = smul.u32 16, %s26
      $region60: #{tpu_custom_call.1} parent=47 // pred_fallthru
        _
    $region48: #{tpu_custom_call.1} parent=5 // pred_fallthru
      _
    %p1370 = scmp.le.s32.totalorder 2, %s16
    // Predicated region
    $region61: #{tpu_custom_call.1} parent=5 // pred_check
      %p1371 = pneg %p1370
    $region62: #{tpu_custom_call.1} parent=5 // pred_check_branch
      %1373 = sbr.rel (%p1371) target = $region64
    $region63: #{tpu_custom_call.1} parent=5 // pred_region
      %s1374 = ssub.s32 %s16, 2
      // Predicated region
      $region65: #{tpu_custom_call.1} parent=63 // pred_check
        %p1375 = pneg %p213
      $region66: #{tpu_custom_call.1} parent=63 // pred_check_branch
        %1377 = sbr.rel (%p1375) target = $region68
      $region67: #{tpu_custom_call.1} parent=63 // pred_region
        %s1378 = smul.u32 16, %s28
        %p1379 = scmp.lt.s32.totalorder %s27, 1
        %s1380 = scalar_select %p1379, %s27, 1
        %p1381 = scmp.lt.s32.totalorder %s1378, 31
        %s1382 = scalar_select %p1381, %s1378, 31
        %s1383 = smul.addr %s1380, 32
        %s1384 = sadd.s32 %s1382, %s1383
        %s1385 = smul.addr %s1384, 4
        %s1386 = scalar_lea.vmem %s7, %s1385
      $region68: #{tpu_custom_call.1} parent=63 // pred_fallthru
        _
      // Predicated region
      $region69: #{tpu_custom_call.1} parent=63 // pred_check
        %p1387 = pneg %p241
      $region70: #{tpu_custom_call.1} parent=63 // pred_check_branch
        %1389 = sbr.rel (%p1387) target = $region72
      $region71: #{tpu_custom_call.1} parent=63 // pred_region
        %s1390 = smul.u32 16, %s28
        %p1391 = scmp.lt.s32.totalorder %s27, 1
        %s1392 = scalar_select %p1391, %s27, 1
        %p1393 = scmp.lt.s32.totalorder %s1390, 31
        %s1394 = scalar_select %p1393, %s1390, 31
        %s1395 = smul.addr %s1392, 32
        %s1396 = sadd.s32 %s1394, %s1395
        %s1397 = smul.addr %s1396, 4
        %s1398 = scalar_lea.vmem %s8, %s1397
      $region72: #{tpu_custom_call.1} parent=63 // pred_fallthru
        _
      // Predicated region
      $region73: #{tpu_custom_call.1} parent=63 // pred_check
        %p1399 = pneg %p269
      $region74: #{tpu_custom_call.1} parent=63 // pred_check_branch
        %1401 = sbr.rel (%p1399) target = $region76
      $region75: #{tpu_custom_call.1} parent=63 // pred_region
        %s1402 = smul.u32 16, %s28
        %p1403 = scmp.lt.s32.totalorder %s27, 1
        %s1404 = scalar_select %p1403, %s27, 1
        %p1405 = scmp.lt.s32.totalorder %s1402, 31
        %s1406 = scalar_select %p1405, %s1402, 31
        %s1407 = smul.addr %s1404, 32
        %s1408 = sadd.s32 %s1406, %s1407
        %s1409 = smul.addr %s1408, 4
        %s1410 = scalar_lea.vmem %s9, %s1409
      $region76: #{tpu_custom_call.1} parent=63 // pred_fallthru
        _
    $region64: #{tpu_custom_call.1} parent=5 // pred_fallthru
      _
  $region6: #{tpu_custom_call.1} parent=0 // loop_footer
    %s20 = sadd.s32 1, %s16
  $region7: #{tpu_custom_call.1} parent=0 // loop_footer_branch
    %15 = sbr.rel target = $region3
  $region8: #{tpu_custom_call.1} parent=0 // loop_exit
    _

</llo_original>
